<compile_context>
chip_gen: v6e
topology: v6e:2x2x1
jax: 0.10.0
libtpu: 0.0.40
codegen_flags: <defaults>
</compile_context>

<pallas_src>
import functools

import jax
import jax.numpy as jnp
from jax.experimental import pallas as pl
from jax.experimental.pallas import tpu as pltpu


def _convlstm_kernel(w_ref, b_ref, p_ref, c_ref, h_out_ref, c_out_ref, *, HC):
    """One batch-block per grid step.

    w_ref : (4*HC, K*K*C)  bf16 flattened OIHW conv weights
    b_ref : (4*HC, 1)      f32 conv bias
    p_ref : (K*K*C, N)     bf16 im2col patches, N = (batch-block)*H*W lanes
    c_ref : (HC, N)        previous cell state
    h_out_ref, c_out_ref : (HC, N)
    """
    # Single im2col matmul on the MXU, bf16 operands, f32 accumulation.
    gates = jnp.dot(w_ref[...], p_ref[...], preferred_element_type=jnp.float32)
    gates = gates + b_ref[...]                      # bias broadcast along lanes

    # Wide activations: one sigmoid over the i/f/o block, one tanh over g.
    ifo = jax.nn.sigmoid(gates[: 3 * HC, :])        # (3*HC, N)
    g_g = jnp.tanh(gates[3 * HC:, :])               # (HC, N)
    i_g = ifo[0 * HC: 1 * HC, :]
    f_g = ifo[1 * HC: 2 * HC, :]
    o_g = ifo[2 * HC: 3 * HC, :]

    c_prev = c_ref[...].astype(jnp.float32)
    c_new = f_g * c_prev + i_g * g_g
    h_new = o_g * jnp.tanh(c_new)

    c_out_ref[...] = c_new.astype(c_out_ref.dtype)  # lane-dense (N mult. of 128)
    h_out_ref[...] = h_new.astype(h_out_ref.dtype)


def _num_tensorcores_per_chip():
    """2 on chips where a 'parallel' grid axis is sharded across cores, else 1."""
    try:
        kind = jax.devices()[0].device_kind.lower()
    except Exception:  # pragma: no cover - defensive
        return 1
    for tag in ("v7", "7x", "v4", "v5p"):
        if tag in kind:
            return 2
    return 1


def conv_lstm_cell(x_nchw, h_nchw, c_nchw, weight_oihw, bias, kernel_size):
    """Pallas ConvLSTMCell forward. Inputs/outputs in NCHW (torch convention).

    weight_oihw: (4*HC, CIN+HC, K, K)  -- torch Conv2d layout.
    """
    B, CIN, H, W = x_nchw.shape
    HC = h_nchw.shape[1]
    K = kernel_size
    assert K % 2 == 1, "padding=(K-1)//2 only matches torch 'same' conv for odd K"
    P = (K - 1) // 2
    C = CIN + HC
    KKC = K * K * C
    HW = H * W

    # ---- wrapper-side prep (tiny tensors; im2col fuses into one XLA op) ----
    xh = jnp.concatenate([x_nchw, h_nchw], axis=1)              # (B, C, H, W)
    xh = jnp.pad(xh, ((0, 0), (0, 0), (P, P), (P, P)))          # (B, C, H+2P, W+2P)
    xh = jnp.transpose(xh, (1, 0, 2, 3))                        # (C, B, Hp, Wp)

    # im2col with rows ordered (c, ky, kx) to match the natural OIHW weight flatten,
    # columns ordered (b, y, x) so the batch folds onto the lane axis.
    taps = [xh[:, :, ky:ky + H, kx:kx + W].reshape(C, B * HW)
            for ky in range(K) for kx in range(K)]
    patches = jnp.stack(taps, axis=1).reshape(KKC, B * HW).astype(jnp.bfloat16)

    w2d = weight_oihw.reshape(4 * HC, KKC).astype(jnp.bfloat16)  # (4*HC, K*K*C)
    b2d = bias.reshape(4 * HC, 1).astype(jnp.float32)
    c2d = jnp.transpose(c_nchw, (1, 0, 2, 3)).reshape(HC, B * HW)

    # ---- generation-aware batch handling ----
    ntc = _num_tensorcores_per_chip()
    nb = ntc if (ntc > 1 and B % ntc == 0) else 1   # grid size over batch blocks
    nblk = (B // nb) * HW                           # lanes per grid step (mult. of 128)

    kernel = functools.partial(_convlstm_kernel, HC=HC)

    h2d, c2d_new = pl.pallas_call(
        kernel,
        out_shape=(
            jax.ShapeDtypeStruct((HC, B * HW), x_nchw.dtype),
            jax.ShapeDtypeStruct((HC, B * HW), x_nchw.dtype),
        ),
        grid_spec=pltpu.PrefetchScalarGridSpec(
            num_scalar_prefetch=0,
            grid=(nb,),
            in_specs=[
                pl.BlockSpec((4 * HC, KKC), lambda b: (0, 0)),   # weights (resident)
                pl.BlockSpec((4 * HC, 1), lambda b: (0, 0)),     # bias
                pl.BlockSpec((KKC, nblk), lambda b: (0, b)),     # im2col patches
                pl.BlockSpec((HC, nblk), lambda b: (0, b)),      # c_prev
            ],
            out_specs=[
                pl.BlockSpec((HC, nblk), lambda b: (0, b)),      # h_new
                pl.BlockSpec((HC, nblk), lambda b: (0, b)),      # c_new
            ],
        ),
        compiler_params=pltpu.CompilerParams(
            dimension_semantics=("parallel",)),
    )(w2d, b2d, patches, c2d)

    # (HC, B*H*W) -> NCHW; these are tiny transposes compared to the old per-tensor
    # NHWC round-trips.
    h_out = jnp.transpose(h2d.reshape(HC, B, H, W), (1, 0, 2, 3))
    c_out = jnp.transpose(c2d_new.reshape(HC, B, H, W), (1, 0, 2, 3))
    return h_out, c_out


def _reference(x_nchw, h_nchw, c_nchw, weight_oihw, bias, kernel_size):
    """Pure-JAX f32 reference mirroring the torch module exactly."""
    P = (kernel_size - 1) // 2
    xh = jnp.concatenate([x_nchw, h_nchw], axis=1)
    gates = jax.lax.conv_general_dilated(
        xh, weight_oihw, window_strides=(1, 1),
        padding=((P, P), (P, P)),
        dimension_numbers=("NCHW", "OIHW", "NCHW")) + bias[None, :, None, None]
    xi, xf, xo, xg = jnp.split(gates, 4, axis=1)
    xi, xf, xo = jax.nn.sigmoid(xi), jax.nn.sigmoid(xf), jax.nn.sigmoid(xo)
    xg = jnp.tanh(xg)
    c_new = xf * c_nchw + xi * xg
    h_new = xo * jnp.tanh(c_new)
    return h_new, c_new


if __name__ == "__main__":
    # Small shapes consistent with the module: B=2, Cin=4, hidden=32, 16x16, k=3.
    B, CIN, HC, H, W, K = 2, 4, 32, 16, 16, 3

    key = jax.random.PRNGKey(0)
    kx, kh, kc, kw, kb = jax.random.split(key, 5)
    x = jax.random.normal(kx, (B, CIN, H, W), dtype=jnp.float32)
    h0 = jax.random.normal(kh, (B, HC, H, W), dtype=jnp.float32)
    c0 = jax.random.normal(kc, (B, HC, H, W), dtype=jnp.float32)

    # Deterministic synthetic parameters (torch Conv2d OIHW layout).
    fan_in = (CIN + HC) * K * K
    bound = 1.0 / (fan_in ** 0.5)
    weight_oihw = jax.random.uniform(
        kw, (4 * HC, CIN + HC, K, K), minval=-bound, maxval=bound,
        dtype=jnp.float32)
    bias = jax.random.uniform(
        kb, (4 * HC,), minval=-bound, maxval=bound, dtype=jnp.float32)

    h1, c1 = jax.jit(conv_lstm_cell, static_argnums=(5,))(
        x, h0, c0, weight_oihw, bias, K)
    jax.block_until_ready((h1, c1))

    h_ref, c_ref = _reference(x, h0, c0, weight_oihw, bias, K)
    # bf16 matmul operands (f32 accumulation) -> looser tolerance than pure f32.
    assert jnp.allclose(h1, h_ref, atol=2e-2, rtol=2e-2), "h mismatch"
    assert jnp.allclose(c1, c_ref, atol=2e-2, rtol=2e-2), "c mismatch"

    print("KERNEL_OK")
</pallas_src>

<mosaic_0001>
module attributes {stable_mosaic.version = 11 : i64} {
  func.func @_convlstm_kernel(%arg0: i32, %arg1: memref<128x324xbf16, #tpu.memory_space<vmem>>, %arg2: memref<128x1xf32, #tpu.memory_space<vmem>>, %arg3: memref<324x512xbf16, #tpu.memory_space<vmem>>, %arg4: memref<32x512xf32, #tpu.memory_space<vmem>>, %arg5: memref<32x512xf32, #tpu.memory_space<vmem>>, %arg6: memref<32x512xf32, #tpu.memory_space<vmem>>) attributes {dimension_semantics = [#tpu.dimension_semantics<parallel>], iteration_bounds = array<i64: 1>, scalar_prefetch = 0 : i64, scratch_operands = 0 : i64, tpu.core_type = #tpu.core_type<tc>, window_params = [{pipeline_mode = #tpu.pipeline_mode<synchronous>, transform_indices = @transform_0, window_bounds = array<i64: 128, 324>}, {pipeline_mode = #tpu.pipeline_mode<synchronous>, transform_indices = @transform_1, window_bounds = array<i64: 128, 1>}, {transform_indices = @transform_2, window_bounds = array<i64: 324, 512>}, {transform_indices = @transform_3, window_bounds = array<i64: 32, 512>}, {transform_indices = @transform_4, window_bounds = array<i64: 32, 512>}, {transform_indices = @transform_5, window_bounds = array<i64: 32, 512>}]} {
    %c0 = arith.constant 0 : index
    %c0_0 = arith.constant 0 : index
    %0 = vector.load %arg1[%c0, %c0_0] : memref<128x324xbf16, #tpu.memory_space<vmem>>, vector<128x324xbf16>
    %c0_1 = arith.constant 0 : index
    %c0_2 = arith.constant 0 : index
    %1 = vector.load %arg3[%c0_1, %c0_2] : memref<324x512xbf16, #tpu.memory_space<vmem>>, vector<324x512xbf16>
    %cst = arith.constant dense<0.000000e+00> : vector<128x512xf32>
    %2 = tpu.matmul %0, %1, %cst {dimension_numbers = #tpu.dot_dimension_numbers<[1], [0], [0], [1], [0, 0, 1, 1], [], []>} : vector<128x324xbf16>, vector<324x512xbf16>, vector<128x512xf32> -> vector<128x512xf32>
    %c0_3 = arith.constant 0 : index
    %c0_4 = arith.constant 0 : index
    %3 = vector.load %arg2[%c0_3, %c0_4] : memref<128x1xf32, #tpu.memory_space<vmem>>, vector<128x1xf32>
    %4 = vector.broadcast %3 : vector<128x1xf32> to vector<128x512xf32>
    %5 = arith.addf %2, %4 : vector<128x512xf32>
    %6 = vector.extract_strided_slice %5 {offsets = [0, 0], sizes = [96, 512], strides = [1, 1]} : vector<128x512xf32> to vector<96x512xf32>
    %7 = arith.negf %6 : vector<96x512xf32>
    %8 = math.exp %7 : vector<96x512xf32>
    %cst_5 = arith.constant 1.000000e+00 : f32
    %9 = vector.broadcast %cst_5 : f32 to vector<96x512xf32>
    %10 = arith.addf %9, %8 : vector<96x512xf32>
    %11 = arith.divf %9, %10 : vector<96x512xf32>
    %12 = vector.extract_strided_slice %5 {offsets = [96, 0], sizes = [32, 512], strides = [1, 1]} : vector<128x512xf32> to vector<32x512xf32>
    %13 = math.tanh %12 : vector<32x512xf32>
    %14 = vector.extract_strided_slice %11 {offsets = [0, 0], sizes = [32, 512], strides = [1, 1]} : vector<96x512xf32> to vector<32x512xf32>
    %15 = vector.extract_strided_slice %11 {offsets = [32, 0], sizes = [32, 512], strides = [1, 1]} : vector<96x512xf32> to vector<32x512xf32>
    %16 = vector.extract_strided_slice %11 {offsets = [64, 0], sizes = [32, 512], strides = [1, 1]} : vector<96x512xf32> to vector<32x512xf32>
    %c0_6 = arith.constant 0 : index
    %c0_7 = arith.constant 0 : index
    %17 = vector.load %arg4[%c0_6, %c0_7] : memref<32x512xf32, #tpu.memory_space<vmem>>, vector<32x512xf32>
    %18 = arith.mulf %15, %17 : vector<32x512xf32>
    %19 = arith.mulf %14, %13 : vector<32x512xf32>
    %20 = arith.addf %18, %19 : vector<32x512xf32>
    %21 = math.tanh %20 : vector<32x512xf32>
    %22 = arith.mulf %16, %21 : vector<32x512xf32>
    %c0_8 = arith.constant 0 : index
    %c0_9 = arith.constant 0 : index
    %23 = vector.load %arg6[%c0_8, %c0_9] : memref<32x512xf32, #tpu.memory_space<vmem>>, vector<32x512xf32>
    tpu.vector_store %arg6[%c0_8, %c0_9], %20 {strides = array<i32>} : memref<32x512xf32, #tpu.memory_space<vmem>>, vector<32x512xf32>,
    %c0_10 = arith.constant 0 : index
    %c0_11 = arith.constant 0 : index
    %24 = vector.load %arg5[%c0_10, %c0_11] : memref<32x512xf32, #tpu.memory_space<vmem>>, vector<32x512xf32>
    tpu.vector_store %arg5[%c0_10, %c0_11], %22 {strides = array<i32>} : memref<32x512xf32, #tpu.memory_space<vmem>>, vector<32x512xf32>,
    return
  }
  func.func @transform_0(%arg0: i32) -> (i32, i32) {
    %c0_i32 = arith.constant 0 : i32
    %c0_i32_0 = arith.constant 0 : i32
    %c0_i32_1 = arith.constant 0 : i32
    return %c0_i32, %c0_i32_0 : i32, i32
  }
  func.func @transform_1(%arg0: i32) -> (i32, i32) {
    %c0_i32 = arith.constant 0 : i32
    %c0_i32_0 = arith.constant 0 : i32
    %c0_i32_1 = arith.constant 0 : i32
    return %c0_i32, %c0_i32_0 : i32, i32
  }
  func.func @transform_2(%arg0: i32) -> (i32, i32) {
    %c0_i32 = arith.constant 0 : i32
    %c0_i32_0 = arith.constant 0 : i32
    return %c0_i32, %arg0 : i32, i32
  }
  func.func @transform_3(%arg0: i32) -> (i32, i32) {
    %c0_i32 = arith.constant 0 : i32
    %c0_i32_0 = arith.constant 0 : i32
    return %c0_i32, %arg0 : i32, i32
  }
  func.func @transform_4(%arg0: i32) -> (i32, i32) {
    %c0_i32 = arith.constant 0 : i32
    %c0_i32_0 = arith.constant 0 : i32
    return %c0_i32, %arg0 : i32, i32
  }
  func.func @transform_5(%arg0: i32) -> (i32, i32) {
    %c0_i32 = arith.constant 0 : i32
    %c0_i32_0 = arith.constant 0 : i32
    return %c0_i32, %arg0 : i32, i32
  }
}

</mosaic_0001>

<llo_original>
// kernel: conv_lstm_cell.1
$region0: #{conv_lstm_cell.1}
  #allocation0 [shape = 'u32[]', space=smem, size = 0x4, offset = 0x4, fixed_abs, tag = 'smem constant byte address 0x4 - core index']
  #allocation1 [shape = 'u32[144,128]{1,0:T(1,128)}', space=vmem, size = 0x12000, scoped, tag = 'internal scratch']
  %s0 = inlined_call_operand.vmem [shape: bf16[128,324], index: 0, kind: input, shape index: {}]
  %s1 = inlined_call_operand.vmem [shape: f32[128,1], index: 1, kind: input, shape index: {}]
  %s2 = inlined_call_operand.vmem [shape: bf16[324,512], index: 2, kind: input, shape index: {}]
  %s3 = inlined_call_operand.vmem [shape: f32[32,512], index: 3, kind: input, shape index: {}]
  %s4 = inlined_call_operand.vmem [shape: f32[32,512], index: 4, kind: output, shape index: {0}]
  %s5 = inlined_call_operand.vmem [shape: f32[32,512], index: 5, kind: output, shape index: {1}]
  %6 = xla_tuple %s4, %s5
  %s7 = sld [smem:[#allocation0]]
  $region34: #{conv_lstm_cell.1} parent=0
    _
  %s9 = ssub.s32 1, %s7
  %s10 = scalar_select 0, %s9, %s7
  // Predicated region
  $region2: #{conv_lstm_cell.1} parent=0 // pred_check
    _
  $region3: #{conv_lstm_cell.1} parent=0 // pred_check_branch
    %12 = sbr.rel (0) target = $region5
  $region4: #{conv_lstm_cell.1} parent=0 // pred_region
    _
  $region5: #{conv_lstm_cell.1} parent=0 // pred_fallthru
    _
  // Predicated region
  $region6: #{conv_lstm_cell.1} parent=0 // pred_check
    _
  $region7: #{conv_lstm_cell.1} parent=0 // pred_check_branch
    %14 = sbr.rel (0) target = $region9
  $region8: #{conv_lstm_cell.1} parent=0 // pred_region
    _
  $region9: #{conv_lstm_cell.1} parent=0 // pred_fallthru
    _
  // Predicated region
  $region10: #{conv_lstm_cell.1} parent=0 // pred_check
    _
  $region11: #{conv_lstm_cell.1} parent=0 // pred_check_branch
    %16 = sbr.rel (0) target = $region13
  $region12: #{conv_lstm_cell.1} parent=0 // pred_region
    _
  $region13: #{conv_lstm_cell.1} parent=0 // pred_fallthru
    _
  // Predicated region
  $region14: #{conv_lstm_cell.1} parent=0 // pred_check
    _
  $region15: #{conv_lstm_cell.1} parent=0 // pred_check_branch
    %18 = sbr.rel (0) target = $region17
  $region16: #{conv_lstm_cell.1} parent=0 // pred_region
    _
  $region17: #{conv_lstm_cell.1} parent=0 // pred_fallthru
    _
  %v20 = vld [vmem:[%s0] sm:$0xff]
  %v21 = vld [vmem:[%s0 + $0x8] sm:$0xf]
  %v22 = vld [vmem:[%s0 + $0xc] sm:$0xff]
  %v23 = vld [vmem:[%s0 + $0x14] sm:$0xf]
  %v24 = vld [vmem:[%s0 + $0x18] sm:$0xff]
  %v25 = vld [vmem:[%s0 + $0x20] sm:$0xf]
  %v26 = vld [vmem:[%s0 + $0x24] sm:$0xff]
  %v27 = vld [vmem:[%s0 + $0x2c] sm:$0xf]
  %v28 = vld [vmem:[%s0 + $0x30] sm:$0xff]
  %v29 = vld [vmem:[%s0 + $0x38] sm:$0xf]
  %v30 = vld [vmem:[%s0 + $0x3c] sm:$0xff]
  %v31 = vld [vmem:[%s0 + $0x44] sm:$0xf]
  %v32 = vld [vmem:[%s0 + $0x48] sm:$0xff]
  %v33 = vld [vmem:[%s0 + $0x50] sm:$0xf]
  %v34 = vld [vmem:[%s0 + $0x54] sm:$0xff]
  %v35 = vld [vmem:[%s0 + $0x5c] sm:$0xf]
  %v36 = vld [vmem:[%s0 + $0x60] sm:$0xff]
  %v37 = vld [vmem:[%s0 + $0x68] sm:$0xf]
  %v38 = vld [vmem:[%s0 + $0x6c] sm:$0xff]
  %v39 = vld [vmem:[%s0 + $0x74] sm:$0xf]
  %v40 = vld [vmem:[%s0 + $0x78] sm:$0xff]
  %v41 = vld [vmem:[%s0 + $0x80] sm:$0xf]
  %v42 = vld [vmem:[%s0 + $0x84] sm:$0xff]
  %v43 = vld [vmem:[%s0 + $0x8c] sm:$0xf]
  %v44 = vld [vmem:[%s0 + $0x90] sm:$0xff]
  %v45 = vld [vmem:[%s0 + $0x98] sm:$0xf]
  %v46 = vld [vmem:[%s0 + $0x9c] sm:$0xff]
  %v47 = vld [vmem:[%s0 + $0xa4] sm:$0xf]
  %v48 = vld [vmem:[%s0 + $0xa8] sm:$0xff]
  %v49 = vld [vmem:[%s0 + $0xb0] sm:$0xf]
  %v50 = vld [vmem:[%s0 + $0xb4] sm:$0xff]
  %v51 = vld [vmem:[%s0 + $0xbc] sm:$0xf]
  %v52 = vld [vmem:[%s2] sm:$0xff]
  %v53 = vld [vmem:[%s2 + $0x8] sm:$0xff]
  %v54 = vld [vmem:[%s2 + $0x10] sm:$0xff]
  %v55 = vld [vmem:[%s2 + $0x18] sm:$0xff]
  %v56 = vld [vmem:[%s2 + $0x20] sm:$0xff]
  %v57 = vld [vmem:[%s2 + $0x28] sm:$0xff]
  %v58 = vld [vmem:[%s2 + $0x30] sm:$0xff]
  %v59 = vld [vmem:[%s2 + $0x38] sm:$0xff]
  %v60 = vld [vmem:[%s2 + $0x40] sm:$0xff]
  %v61 = vld [vmem:[%s2 + $0x48] sm:$0xff]
  %v62 = vld [vmem:[%s2 + $0x50] sm:$0xff]
  %v63 = vld [vmem:[%s2 + $0x58] sm:$0xff]
  %v64 = vld [vmem:[%s2 + $0x60] sm:$0xff]
  %v65 = vld [vmem:[%s2 + $0x68] sm:$0xff]
  %v66 = vld [vmem:[%s2 + $0x70] sm:$0xff]
  %v67 = vld [vmem:[%s2 + $0x78] sm:$0xff]
  %v68 = vld [vmem:[%s2 + $0x80] sm:$0xff]
  %v69 = vld [vmem:[%s2 + $0x88] sm:$0xff]
  %v70 = vld [vmem:[%s2 + $0x90] sm:$0xff]
  %v71 = vld [vmem:[%s2 + $0x98] sm:$0xff]
  %v72 = vld [vmem:[%s2 + $0xa0] sm:$0xff]
  %v73 = vld [vmem:[%s2 + $0xa8] sm:$0xff]
  %v74 = vld [vmem:[%s2 + $0xb0] sm:$0xff]
  %v75 = vld [vmem:[%s2 + $0xb8] sm:$0xff]
  %v76 = vld [vmem:[%s2 + $0xc0] sm:$0xff]
  %v77 = vld [vmem:[%s2 + $0xc8] sm:$0xff]
  %v78 = vld [vmem:[%s2 + $0xd0] sm:$0xff]
  %v79 = vld [vmem:[%s2 + $0xd8] sm:$0xff]
  %v80 = vld [vmem:[%s2 + $0xe0] sm:$0xff]
  %v81 = vld [vmem:[%s2 + $0xe8] sm:$0xff]
  %v82 = vld [vmem:[%s2 + $0xf0] sm:$0xff]
  %v83 = vld [vmem:[%s2 + $0xf8] sm:$0xff]
  %v84 = vld [vmem:[%s2 + $0x100] sm:$0xff]
  %v85 = vld [vmem:[%s2 + $0x108] sm:$0xff]
  %v86 = vld [vmem:[%s2 + $0x110] sm:$0xff]
  %v87 = vld [vmem:[%s2 + $0x118] sm:$0xff]
  %v88 = vld [vmem:[%s2 + $0x120] sm:$0xff]
  %v89 = vld [vmem:[%s2 + $0x128] sm:$0xff]
  %v90 = vld [vmem:[%s2 + $0x130] sm:$0xff]
  %v91 = vld [vmem:[%s2 + $0x138] sm:$0xff]
  %v92 = vld [vmem:[%s2 + $0x140] sm:$0xff]
  %v93 = vld [vmem:[%s2 + $0x148] sm:$0xff]
  %v94 = vld [vmem:[%s2 + $0x150] sm:$0xff]
  %v95 = vld [vmem:[%s2 + $0x158] sm:$0xff]
  %v96 = vld [vmem:[%s2 + $0x160] sm:$0xff]
  %v97 = vld [vmem:[%s2 + $0x168] sm:$0xff]
  %v98 = vld [vmem:[%s2 + $0x170] sm:$0xff]
  %v99 = vld [vmem:[%s2 + $0x178] sm:$0xff]
  %v100 = vld [vmem:[%s2 + $0x180] sm:$0xff]
  %v101 = vld [vmem:[%s2 + $0x188] sm:$0xff]
  %v102 = vld [vmem:[%s2 + $0x190] sm:$0xff]
  %v103 = vld [vmem:[%s2 + $0x198] sm:$0xff]
  %v104 = vld [vmem:[%s2 + $0x1a0] sm:$0xff]
  %v105 = vld [vmem:[%s2 + $0x1a8] sm:$0xff]
  %v106 = vld [vmem:[%s2 + $0x1b0] sm:$0xff]
  %v107 = vld [vmem:[%s2 + $0x1b8] sm:$0xff]
  %v108 = vld [vmem:[%s2 + $0x1c0] sm:$0xff]
  %v109 = vld [vmem:[%s2 + $0x1c8] sm:$0xff]
  %v110 = vld [vmem:[%s2 + $0x1d0] sm:$0xff]
  %v111 = vld [vmem:[%s2 + $0x1d8] sm:$0xff]
  %v112 = vld [vmem:[%s2 + $0x1e0] sm:$0xff]
  %v113 = vld [vmem:[%s2 + $0x1e8] sm:$0xff]
  %v114 = vld [vmem:[%s2 + $0x1f0] sm:$0xff]
  %v115 = vld [vmem:[%s2 + $0x1f8] sm:$0xff]
  %v116 = vld [vmem:[%s2 + $0x200] sm:$0xff]
  %v117 = vld [vmem:[%s2 + $0x208] sm:$0xff]
  %v118 = vld [vmem:[%s2 + $0x210] sm:$0xff]
  %v119 = vld [vmem:[%s2 + $0x218] sm:$0xff]
  %v120 = vld [vmem:[%s2 + $0x220] sm:$0xff]
  %v121 = vld [vmem:[%s2 + $0x228] sm:$0xff]
  %v122 = vld [vmem:[%s2 + $0x230] sm:$0xff]
  %v123 = vld [vmem:[%s2 + $0x238] sm:$0xff]
  %v124 = vld [vmem:[%s2 + $0x240] sm:$0xff]
  %v125 = vld [vmem:[%s2 + $0x248] sm:$0xff]
  %v126 = vld [vmem:[%s2 + $0x250] sm:$0xff]
  %v127 = vld [vmem:[%s2 + $0x258] sm:$0xff]
  %v128 = vld [vmem:[%s2 + $0x260] sm:$0xff]
  %v129 = vld [vmem:[%s2 + $0x268] sm:$0xff]
  %v130 = vld [vmem:[%s2 + $0x270] sm:$0xff]
  %v131 = vld [vmem:[%s2 + $0x278] sm:$0xff]
  %v132 = vld [vmem:[%s2 + $0x280] sm:$0x33]
  %v133 = vld [vmem:[%s2 + $0x288] sm:$0x33]
  %v134 = vld [vmem:[%s1] sm:$0xff]
  %v135 = vld [vmem:[%s1 + $0x8] sm:$0xff]
  %v136 = vld [vmem:[%s1 + $0x10] sm:$0xff]
  %v137 = vld [vmem:[%s1 + $0x18] sm:$0xff]
  %v138 = vld [vmem:[%s1 + $0x20] sm:$0xff]
  %v139 = vld [vmem:[%s1 + $0x28] sm:$0xff]
  %v140 = vld [vmem:[%s1 + $0x30] sm:$0xff]
  %v141 = vld [vmem:[%s1 + $0x38] sm:$0xff]
  %v142 = vld [vmem:[%s1 + $0x40] sm:$0xff]
  %v143 = vld [vmem:[%s1 + $0x48] sm:$0xff]
  %v144 = vld [vmem:[%s1 + $0x50] sm:$0xff]
  %v145 = vld [vmem:[%s1 + $0x58] sm:$0xff]
  %v146 = vld [vmem:[%s1 + $0x60] sm:$0xff]
  %v147 = vld [vmem:[%s1 + $0x68] sm:$0xff]
  %v148 = vld [vmem:[%s1 + $0x70] sm:$0xff]
  %v149 = vld [vmem:[%s1 + $0x78] sm:$0xff]
  %151 = vset.pattern.permute.xlu0 0
  %152 = vperm.xlu0 %151, %v134
  %v153 = vpop.permute.xlu0 %152
  %156 = vset.pattern.permute.xlu0 0
  %157 = vperm.xlu0 %156, %v135
  %v158 = vpop.permute.xlu0 %157
  %161 = vset.pattern.permute.xlu0 0
  %162 = vperm.xlu0 %161, %v136
  %v163 = vpop.permute.xlu0 %162
  %166 = vset.pattern.permute.xlu0 0
  %167 = vperm.xlu0 %166, %v137
  %v168 = vpop.permute.xlu0 %167
  %171 = vset.pattern.permute.xlu0 0
  %172 = vperm.xlu0 %171, %v138
  %v173 = vpop.permute.xlu0 %172
  %176 = vset.pattern.permute.xlu0 0
  %177 = vperm.xlu0 %176, %v139
  %v178 = vpop.permute.xlu0 %177
  %181 = vset.pattern.permute.xlu0 0
  %182 = vperm.xlu0 %181, %v140
  %v183 = vpop.permute.xlu0 %182
  %186 = vset.pattern.permute.xlu0 0
  %187 = vperm.xlu0 %186, %v141
  %v188 = vpop.permute.xlu0 %187
  %191 = vset.pattern.permute.xlu0 0
  %192 = vperm.xlu0 %191, %v142
  %v193 = vpop.permute.xlu0 %192
  %196 = vset.pattern.permute.xlu0 0
  %197 = vperm.xlu0 %196, %v143
  %v198 = vpop.permute.xlu0 %197
  %201 = vset.pattern.permute.xlu0 0
  %202 = vperm.xlu0 %201, %v144
  %v203 = vpop.permute.xlu0 %202
  %206 = vset.pattern.permute.xlu0 0
  %207 = vperm.xlu0 %206, %v145
  %v208 = vpop.permute.xlu0 %207
  %211 = vset.pattern.permute.xlu0 0
  %212 = vperm.xlu0 %211, %v146
  %v213 = vpop.permute.xlu0 %212
  %216 = vset.pattern.permute.xlu0 0
  %217 = vperm.xlu0 %216, %v147
  %v218 = vpop.permute.xlu0 %217
  %221 = vset.pattern.permute.xlu0 0
  %222 = vperm.xlu0 %221, %v148
  %v223 = vpop.permute.xlu0 %222
  %226 = vset.pattern.permute.xlu0 0
  %227 = vperm.xlu0 %226, %v149
  %v228 = vpop.permute.xlu0 %227
  %v262 = vunpack.c.l.b16 %v20
  %v263 = vunpack.c.h.b16 %v20
  %v264 = vunpack.c.l.b16 %v21
  %v265 = vunpack.c.l.b16 %v22
  %v266 = vunpack.c.h.b16 %v22
  %v267 = vunpack.c.l.b16 %v23
  %v268 = vunpack.c.l.b16 %v24
  %v269 = vunpack.c.h.b16 %v24
  %v270 = vunpack.c.l.b16 %v25
  %v271 = vunpack.c.l.b16 %v26
  %v272 = vunpack.c.h.b16 %v26
  %v273 = vunpack.c.l.b16 %v27
  %v274 = vunpack.c.l.b16 %v28
  %v275 = vunpack.c.h.b16 %v28
  %v276 = vunpack.c.l.b16 %v29
  %v277 = vunpack.c.l.b16 %v30
  %v278 = vunpack.c.h.b16 %v30
  %v279 = vunpack.c.l.b16 %v31
  %v280 = vunpack.c.l.b16 %v32
  %v281 = vunpack.c.h.b16 %v32
  %v282 = vunpack.c.l.b16 %v33
  %v283 = vunpack.c.l.b16 %v34
  %v284 = vunpack.c.h.b16 %v34
  %v285 = vunpack.c.l.b16 %v35
  %v286 = vunpack.c.l.b16 %v36
  %v287 = vunpack.c.h.b16 %v36
  %v288 = vunpack.c.l.b16 %v37
  %v289 = vunpack.c.l.b16 %v38
  %v290 = vunpack.c.h.b16 %v38
  %v291 = vunpack.c.l.b16 %v39
  %v292 = vunpack.c.l.b16 %v40
  %v293 = vunpack.c.h.b16 %v40
  %v294 = vunpack.c.l.b16 %v41
  %v295 = vunpack.c.l.b16 %v42
  %v296 = vunpack.c.h.b16 %v42
  %v297 = vunpack.c.l.b16 %v43
  %v298 = vunpack.c.l.b16 %v44
  %v299 = vunpack.c.h.b16 %v44
  %v300 = vunpack.c.l.b16 %v45
  %v301 = vunpack.c.l.b16 %v46
  %v302 = vunpack.c.h.b16 %v46
  %v303 = vunpack.c.l.b16 %v47
  %v304 = vunpack.c.l.b16 %v48
  %v305 = vunpack.c.h.b16 %v48
  %v306 = vunpack.c.l.b16 %v49
  %v307 = vunpack.c.l.b16 %v50
  %v308 = vunpack.c.h.b16 %v50
  %v309 = vunpack.c.l.b16 %v51
  %v310 = vpack.c.b16 %v265, %v262
  %v311 = vpack.c.b16 %v266, %v263
  %v312 = vpack.c.b16 %v267, %v264
  %v313 = vpack.c.b16 %v271, %v268
  %v314 = vpack.c.b16 %v272, %v269
  %v315 = vpack.c.b16 %v273, %v270
  %v316 = vpack.c.b16 %v277, %v274
  %v317 = vpack.c.b16 %v278, %v275
  %v318 = vpack.c.b16 %v279, %v276
  %v319 = vpack.c.b16 %v283, %v280
  %v320 = vpack.c.b16 %v284, %v281
  %v321 = vpack.c.b16 %v285, %v282
  %v322 = vpack.c.b16 %v289, %v286
  %v323 = vpack.c.b16 %v290, %v287
  %v324 = vpack.c.b16 %v291, %v288
  %v325 = vpack.c.b16 %v295, %v292
  %v326 = vpack.c.b16 %v296, %v293
  %v327 = vpack.c.b16 %v297, %v294
  %v328 = vpack.c.b16 %v301, %v298
  %v329 = vpack.c.b16 %v302, %v299
  %v330 = vpack.c.b16 %v303, %v300
  %v331 = vpack.c.b16 %v307, %v304
  %v332 = vpack.c.b16 %v308, %v305
  %v333 = vpack.c.b16 %v309, %v306
  %v432 = vunpack.c.l.b16 %v52
  %v433 = vunpack.c.h.b16 %v52
  %v434 = vunpack.c.l.b16 %v53
  %v435 = vunpack.c.h.b16 %v53
  %v436 = vunpack.c.l.b16 %v54
  %v437 = vunpack.c.h.b16 %v54
  %v438 = vunpack.c.l.b16 %v55
  %v439 = vunpack.c.h.b16 %v55
  %v440 = vunpack.c.l.b16 %v56
  %v441 = vunpack.c.h.b16 %v56
  %v442 = vunpack.c.l.b16 %v57
  %v443 = vunpack.c.h.b16 %v57
  %v444 = vunpack.c.l.b16 %v58
  %v445 = vunpack.c.h.b16 %v58
  %v446 = vunpack.c.l.b16 %v59
  %v447 = vunpack.c.h.b16 %v59
  %v448 = vunpack.c.l.b16 %v60
  %v449 = vunpack.c.h.b16 %v60
  %v450 = vunpack.c.l.b16 %v61
  %v451 = vunpack.c.h.b16 %v61
  %v452 = vunpack.c.l.b16 %v62
  %v453 = vunpack.c.h.b16 %v62
  %v454 = vunpack.c.l.b16 %v63
  %v455 = vunpack.c.h.b16 %v63
  %v456 = vunpack.c.l.b16 %v64
  %v457 = vunpack.c.h.b16 %v64
  %v458 = vunpack.c.l.b16 %v65
  %v459 = vunpack.c.h.b16 %v65
  %v460 = vunpack.c.l.b16 %v66
  %v461 = vunpack.c.h.b16 %v66
  %v462 = vunpack.c.l.b16 %v67
  %v463 = vunpack.c.h.b16 %v67
  %v464 = vunpack.c.l.b16 %v68
  %v465 = vunpack.c.h.b16 %v68
  %v466 = vunpack.c.l.b16 %v69
  %v467 = vunpack.c.h.b16 %v69
  %v468 = vunpack.c.l.b16 %v70
  %v469 = vunpack.c.h.b16 %v70
  %v470 = vunpack.c.l.b16 %v71
  %v471 = vunpack.c.h.b16 %v71
  %v472 = vunpack.c.l.b16 %v72
  %v473 = vunpack.c.h.b16 %v72
  %v474 = vunpack.c.l.b16 %v73
  %v475 = vunpack.c.h.b16 %v73
  %v476 = vunpack.c.l.b16 %v74
  %v477 = vunpack.c.h.b16 %v74
  %v478 = vunpack.c.l.b16 %v75
  %v479 = vunpack.c.h.b16 %v75
  %v480 = vunpack.c.l.b16 %v76
  %v481 = vunpack.c.h.b16 %v76
  %v482 = vunpack.c.l.b16 %v77
  %v483 = vunpack.c.h.b16 %v77
  %v484 = vunpack.c.l.b16 %v78
  %v485 = vunpack.c.h.b16 %v78
  %v486 = vunpack.c.l.b16 %v79
  %v487 = vunpack.c.h.b16 %v79
  %v488 = vunpack.c.l.b16 %v80
  %v489 = vunpack.c.h.b16 %v80
  %v490 = vunpack.c.l.b16 %v81
  %v491 = vunpack.c.h.b16 %v81
  %v492 = vunpack.c.l.b16 %v82
  %v493 = vunpack.c.h.b16 %v82
  %v494 = vunpack.c.l.b16 %v83
  %v495 = vunpack.c.h.b16 %v83
  %v496 = vunpack.c.l.b16 %v84
  %v497 = vunpack.c.h.b16 %v84
  %v498 = vunpack.c.l.b16 %v85
  %v499 = vunpack.c.h.b16 %v85
  %v500 = vunpack.c.l.b16 %v86
  %v501 = vunpack.c.h.b16 %v86
  %v502 = vunpack.c.l.b16 %v87
  %v503 = vunpack.c.h.b16 %v87
  %v504 = vunpack.c.l.b16 %v88
  %v505 = vunpack.c.h.b16 %v88
  %v506 = vunpack.c.l.b16 %v89
  %v507 = vunpack.c.h.b16 %v89
  %v508 = vunpack.c.l.b16 %v90
  %v509 = vunpack.c.h.b16 %v90
  %v510 = vunpack.c.l.b16 %v91
  %v511 = vunpack.c.h.b16 %v91
  %v512 = vunpack.c.l.b16 %v92
  %v513 = vunpack.c.h.b16 %v92
  %v514 = vunpack.c.l.b16 %v93
  %v515 = vunpack.c.h.b16 %v93
  %v516 = vunpack.c.l.b16 %v94
  %v517 = vunpack.c.h.b16 %v94
  %v518 = vunpack.c.l.b16 %v95
  %v519 = vunpack.c.h.b16 %v95
  %v520 = vunpack.c.l.b16 %v96
  %v521 = vunpack.c.h.b16 %v96
  %v522 = vunpack.c.l.b16 %v97
  %v523 = vunpack.c.h.b16 %v97
  %v524 = vunpack.c.l.b16 %v98
  %v525 = vunpack.c.h.b16 %v98
  %v526 = vunpack.c.l.b16 %v99
  %v527 = vunpack.c.h.b16 %v99
  %v528 = vunpack.c.l.b16 %v100
  %v529 = vunpack.c.h.b16 %v100
  %v530 = vunpack.c.l.b16 %v101
  %v531 = vunpack.c.h.b16 %v101
  %v532 = vunpack.c.l.b16 %v102
  %v533 = vunpack.c.h.b16 %v102
  %v534 = vunpack.c.l.b16 %v103
  %v535 = vunpack.c.h.b16 %v103
  %v536 = vunpack.c.l.b16 %v104
  %v537 = vunpack.c.h.b16 %v104
  %v538 = vunpack.c.l.b16 %v105
  %v539 = vunpack.c.h.b16 %v105
  %v540 = vunpack.c.l.b16 %v106
  %v541 = vunpack.c.h.b16 %v106
  %v542 = vunpack.c.l.b16 %v107
  %v543 = vunpack.c.h.b16 %v107
  %v544 = vunpack.c.l.b16 %v108
  %v545 = vunpack.c.h.b16 %v108
  %v546 = vunpack.c.l.b16 %v109
  %v547 = vunpack.c.h.b16 %v109
  %v548 = vunpack.c.l.b16 %v110
  %v549 = vunpack.c.h.b16 %v110
  %v550 = vunpack.c.l.b16 %v111
  %v551 = vunpack.c.h.b16 %v111
  %v552 = vunpack.c.l.b16 %v112
  %v553 = vunpack.c.h.b16 %v112
  %v554 = vunpack.c.l.b16 %v113
  %v555 = vunpack.c.h.b16 %v113
  %v556 = vunpack.c.l.b16 %v114
  %v557 = vunpack.c.h.b16 %v114
  %v558 = vunpack.c.l.b16 %v115
  %v559 = vunpack.c.h.b16 %v115
  %v560 = vunpack.c.l.b16 %v116
  %v561 = vunpack.c.h.b16 %v116
  %v562 = vunpack.c.l.b16 %v117
  %v563 = vunpack.c.h.b16 %v117
  %v564 = vunpack.c.l.b16 %v118
  %v565 = vunpack.c.h.b16 %v118
  %v566 = vunpack.c.l.b16 %v119
  %v567 = vunpack.c.h.b16 %v119
  %v568 = vunpack.c.l.b16 %v120
  %v569 = vunpack.c.h.b16 %v120
  %v570 = vunpack.c.l.b16 %v121
  %v571 = vunpack.c.h.b16 %v121
  %v572 = vunpack.c.l.b16 %v122
  %v573 = vunpack.c.h.b16 %v122
  %v574 = vunpack.c.l.b16 %v123
  %v575 = vunpack.c.h.b16 %v123
  %v576 = vunpack.c.l.b16 %v124
  %v577 = vunpack.c.h.b16 %v124
  %v578 = vunpack.c.l.b16 %v125
  %v579 = vunpack.c.h.b16 %v125
  %v580 = vunpack.c.l.b16 %v126
  %v581 = vunpack.c.h.b16 %v126
  %v582 = vunpack.c.l.b16 %v127
  %v583 = vunpack.c.h.b16 %v127
  %v584 = vunpack.c.l.b16 %v128
  %v585 = vunpack.c.h.b16 %v128
  %v586 = vunpack.c.l.b16 %v129
  %v587 = vunpack.c.h.b16 %v129
  %v588 = vunpack.c.l.b16 %v130
  %v589 = vunpack.c.h.b16 %v130
  %v590 = vunpack.c.l.b16 %v131
  %v591 = vunpack.c.h.b16 %v131
  %v592 = vunpack.c.l.b16 %v132
  %v593 = vunpack.c.h.b16 %v132
  %v594 = vunpack.c.l.b16 %v133
  %v595 = vunpack.c.h.b16 %v133
  %v596 = vpack.c.b16 %v436, %v432
  %v597 = vpack.c.b16 %v437, %v433
  %v598 = vpack.c.b16 %v438, %v434
  %v599 = vpack.c.b16 %v439, %v435
  %v600 = vpack.c.b16 %v444, %v440
  %v601 = vpack.c.b16 %v445, %v441
  %v602 = vpack.c.b16 %v446, %v442
  %v603 = vpack.c.b16 %v447, %v443
  %v604 = vpack.c.b16 %v452, %v448
  %v605 = vpack.c.b16 %v453, %v449
  %v606 = vpack.c.b16 %v454, %v450
  %v607 = vpack.c.b16 %v455, %v451
  %v608 = vpack.c.b16 %v460, %v456
  %v609 = vpack.c.b16 %v461, %v457
  %v610 = vpack.c.b16 %v462, %v458
  %v611 = vpack.c.b16 %v463, %v459
  %v612 = vpack.c.b16 %v468, %v464
  %v613 = vpack.c.b16 %v469, %v465
  %v614 = vpack.c.b16 %v470, %v466
  %v615 = vpack.c.b16 %v471, %v467
  %v616 = vpack.c.b16 %v476, %v472
  %v617 = vpack.c.b16 %v477, %v473
  %v618 = vpack.c.b16 %v478, %v474
  %v619 = vpack.c.b16 %v479, %v475
  %v620 = vpack.c.b16 %v484, %v480
  %v621 = vpack.c.b16 %v485, %v481
  %v622 = vpack.c.b16 %v486, %v482
  %v623 = vpack.c.b16 %v487, %v483
  %v624 = vpack.c.b16 %v492, %v488
  %v625 = vpack.c.b16 %v493, %v489
  %v626 = vpack.c.b16 %v494, %v490
  %v627 = vpack.c.b16 %v495, %v491
  %v628 = vpack.c.b16 %v500, %v496
  %v629 = vpack.c.b16 %v501, %v497
  %v630 = vpack.c.b16 %v502, %v498
  %v631 = vpack.c.b16 %v503, %v499
  %v632 = vpack.c.b16 %v508, %v504
  %v633 = vpack.c.b16 %v509, %v505
  %v634 = vpack.c.b16 %v510, %v506
  %v635 = vpack.c.b16 %v511, %v507
  %v636 = vpack.c.b16 %v516, %v512
  %v637 = vpack.c.b16 %v517, %v513
  %v638 = vpack.c.b16 %v518, %v514
  %v639 = vpack.c.b16 %v519, %v515
  %v640 = vpack.c.b16 %v524, %v520
  %v641 = vpack.c.b16 %v525, %v521
  %v642 = vpack.c.b16 %v526, %v522
  %v643 = vpack.c.b16 %v527, %v523
  %v644 = vpack.c.b16 %v532, %v528
  %v645 = vpack.c.b16 %v533, %v529
  %v646 = vpack.c.b16 %v534, %v530
  %v647 = vpack.c.b16 %v535, %v531
  %v648 = vpack.c.b16 %v540, %v536
  %v649 = vpack.c.b16 %v541, %v537
  %v650 = vpack.c.b16 %v542, %v538
  %v651 = vpack.c.b16 %v543, %v539
  %v652 = vpack.c.b16 %v548, %v544
  %v653 = vpack.c.b16 %v549, %v545
  %v654 = vpack.c.b16 %v550, %v546
  %v655 = vpack.c.b16 %v551, %v547
  %v656 = vpack.c.b16 %v556, %v552
  %v657 = vpack.c.b16 %v557, %v553
  %v658 = vpack.c.b16 %v558, %v554
  %v659 = vpack.c.b16 %v559, %v555
  %v660 = vpack.c.b16 %v564, %v560
  %v661 = vpack.c.b16 %v565, %v561
  %v662 = vpack.c.b16 %v566, %v562
  %v663 = vpack.c.b16 %v567, %v563
  %v664 = vpack.c.b16 %v572, %v568
  %v665 = vpack.c.b16 %v573, %v569
  %v666 = vpack.c.b16 %v574, %v570
  %v667 = vpack.c.b16 %v575, %v571
  %v668 = vpack.c.b16 %v580, %v576
  %v669 = vpack.c.b16 %v581, %v577
  %v670 = vpack.c.b16 %v582, %v578
  %v671 = vpack.c.b16 %v583, %v579
  %v672 = vpack.c.b16 %v588, %v584
  %v673 = vpack.c.b16 %v589, %v585
  %v674 = vpack.c.b16 %v590, %v586
  %v675 = vpack.c.b16 %v591, %v587
  %v676 = vpack.c.b16 %v592, %v592
  %v677 = vpack.c.b16 %v593, %v593
  %v678 = vpack.c.b16 %v594, %v594
  %v679 = vpack.c.b16 %v595, %v595
  %vm760 = vcmask 556032
  %v762 = vsel %vm760, %v312, 0
  %v765 = vsel %vm760, %v315, 0
  %v768 = vsel %vm760, %v318, 0
  %v771 = vsel %vm760, %v321, 0
  %v774 = vsel %vm760, %v324, 0
  %v777 = vsel %vm760, %v327, 0
  %v780 = vsel %vm760, %v330, 0
  %v783 = vsel %vm760, %v333, 0
  %vm785 = vcmask 1041408
  %v787 = vsel %vm785, %v676, 0
  %v790 = vsel %vm785, %v677, 0
  %v793 = vsel %vm785, %v678, 0
  %v796 = vsel %vm785, %v679, 0
  %798 = vmatprep.subr.bf16.mxu0 %v625
  %799 = vmatpush1.bf16.msra.mxu0 %v624
  %800 = vmatprep.subr.bf16.mxu0 %v621
  %801 = vmatpush1.bf16.msra.mxu0 %v620
  %802 = vmatprep.subr.bf16.mxu0 %v617
  %803 = vmatpush1.bf16.msra.mxu0 %v616
  %804 = vmatprep.subr.bf16.mxu0 %v613
  %805 = vmatpush1.bf16.msra.mxu0 %v612
  %806 = vmatprep.subr.bf16.mxu0 %v609
  %807 = vmatpush1.bf16.msra.mxu0 %v608
  %808 = vmatprep.subr.bf16.mxu0 %v605
  %809 = vmatpush1.bf16.msra.mxu0 %v604
  %810 = vmatprep.subr.bf16.mxu0 %v601
  %811 = vmatpush1.bf16.msra.mxu0 %v600
  %812 = vmatprep.subr.bf16.mxu0 %v597
  %813 = vmatpush1.bf16.msra.mxu0 %v596
  %814 = vmatprep.subr.bf16.mxu0 %v657
  %815 = vmatpush2.bf16.msra.mxu0 %v656
  %816 = vmatprep.subr.bf16.mxu0 %v653
  %817 = vmatpush2.bf16.msra.mxu0 %v652
  %818 = vmatprep.subr.bf16.mxu0 %v649
  %819 = vmatpush2.bf16.msra.mxu0 %v648
  %820 = vmatprep.subr.bf16.mxu0 %v645
  %821 = vmatpush2.bf16.msra.mxu0 %v644
  %822 = vmatprep.subr.bf16.mxu0 %v641
  %823 = vmatpush2.bf16.msra.mxu0 %v640
  %824 = vmatprep.subr.bf16.mxu0 %v637
  %825 = vmatpush2.bf16.msra.mxu0 %v636
  %826 = vmatprep.subr.bf16.mxu0 %v633
  %827 = vmatpush2.bf16.msra.mxu0 %v632
  %828 = vmatprep.subr.bf16.mxu0 %v629
  %829 = vmatpush2.bf16.msra.mxu0 %v628
  %830 = vmatprep.mubr.bf16.mxu0 %v311
  %831 = vmatmul.mubr.bf16.gmra.mxu0 %v310
  %v832 = vpop.f32.mrf.mxu0
  %v833 = vadd.f32 %v153, %v832
  %v834 = vpop.f32.mrf.mxu0
  %v835 = vadd.f32 %v153, %v834
  %v836 = vpop.f32.mrf.mxu0
  %v837 = vadd.f32 %v158, %v836
  %v838 = vpop.f32.mrf.mxu0
  %v839 = vadd.f32 %v158, %v838
  %840 = vmatprep.mubr.bf16.mxu0 %v314
  %841 = vmatmul.mubr.bf16.gmra.mxu0 %v313
  %v842 = vpop.f32.mrf.mxu0
  %v843 = vadd.f32 %v163, %v842
  %v844 = vpop.f32.mrf.mxu0
  %v845 = vadd.f32 %v163, %v844
  %v846 = vpop.f32.mrf.mxu0
  %v847 = vadd.f32 %v168, %v846
  %v848 = vpop.f32.mrf.mxu0
  %v849 = vadd.f32 %v168, %v848
  %850 = vmatprep.mubr.bf16.mxu0 %v317
  %851 = vmatmul.mubr.bf16.gmra.mxu0 %v316
  %v852 = vpop.f32.mrf.mxu0
  %v853 = vadd.f32 %v173, %v852
  %v854 = vpop.f32.mrf.mxu0
  %v855 = vadd.f32 %v173, %v854
  %v856 = vpop.f32.mrf.mxu0
  %v857 = vadd.f32 %v178, %v856
  %v858 = vpop.f32.mrf.mxu0
  %v859 = vadd.f32 %v178, %v858
  %860 = vmatprep.mubr.bf16.mxu0 %v320
  %861 = vmatmul.mubr.bf16.gmra.mxu0 %v319
  %v862 = vpop.f32.mrf.mxu0
  %v863 = vadd.f32 %v183, %v862
  %v864 = vpop.f32.mrf.mxu0
  %v865 = vadd.f32 %v183, %v864
  %v866 = vpop.f32.mrf.mxu0
  %v867 = vadd.f32 %v188, %v866
  %v868 = vpop.f32.mrf.mxu0
  %v869 = vadd.f32 %v188, %v868
  %870 = vmatprep.mubr.bf16.mxu0 %v323
  %871 = vmatmul.mubr.bf16.gmra.mxu0 %v322
  %v872 = vpop.f32.mrf.mxu0
  %v873 = vadd.f32 %v193, %v872
  %v874 = vpop.f32.mrf.mxu0
  %v875 = vadd.f32 %v193, %v874
  %v876 = vpop.f32.mrf.mxu0
  %v877 = vadd.f32 %v198, %v876
  %v878 = vpop.f32.mrf.mxu0
  %v879 = vadd.f32 %v198, %v878
  %880 = vmatprep.mubr.bf16.mxu0 %v326
  %881 = vmatmul.mubr.bf16.gmra.mxu0 %v325
  %v882 = vpop.f32.mrf.mxu0
  %v883 = vadd.f32 %v203, %v882
  %v884 = vpop.f32.mrf.mxu0
  %v885 = vadd.f32 %v203, %v884
  %v886 = vpop.f32.mrf.mxu0
  %v887 = vadd.f32 %v208, %v886
  %v888 = vpop.f32.mrf.mxu0
  %v889 = vadd.f32 %v208, %v888
  %890 = vmatprep.mubr.bf16.mxu0 %v329
  %891 = vmatmul.mubr.bf16.gmra.mxu0 %v328
  %v892 = vpop.f32.mrf.mxu0
  %v893 = vadd.f32 %v213, %v892
  %v894 = vpop.f32.mrf.mxu0
  %v895 = vadd.f32 %v213, %v894
  %v896 = vpop.f32.mrf.mxu0
  %v897 = vadd.f32 %v218, %v896
  %v898 = vpop.f32.mrf.mxu0
  %v899 = vadd.f32 %v218, %v898
  %900 = vmatprep.mubr.bf16.mxu0 %v332
  %901 = vmatmul.mubr.bf16.gmra.mxu0 %v331
  %v902 = vpop.f32.mrf.mxu0
  %v903 = vadd.f32 %v223, %v902
  %v904 = vpop.f32.mrf.mxu0
  %v905 = vadd.f32 %v223, %v904
  %v906 = vpop.f32.mrf.mxu0
  %v907 = vadd.f32 %v228, %v906
  %v908 = vpop.f32.mrf.mxu0
  %v909 = vadd.f32 %v228, %v908
  %910 = vdwg.mxu0
  %911 = vmatprep.subr.bf16.mxu0 0
  %912 = vmatpush1.bf16.msra.mxu0 0
  %913 = vmatprep.subr.bf16.mxu0 0
  %914 = vmatpush1.bf16.msra.mxu0 0
  %915 = vmatprep.subr.bf16.mxu0 0
  %916 = vmatpush1.bf16.msra.mxu0 0
  %917 = vmatprep.subr.bf16.mxu0 %v790
  %918 = vmatpush1.bf16.msra.mxu0 %v787
  %919 = vmatprep.subr.bf16.mxu0 %v673
  %920 = vmatpush1.bf16.msra.mxu0 %v672
  %921 = vmatprep.subr.bf16.mxu0 %v669
  %922 = vmatpush1.bf16.msra.mxu0 %v668
  %923 = vmatprep.subr.bf16.mxu0 %v665
  %924 = vmatpush1.bf16.msra.mxu0 %v664
  %925 = vmatprep.subr.bf16.mxu0 %v661
  %926 = vmatpush1.bf16.msra.mxu0 %v660
  %927 = vmatprep.subr.bf16.mxu0 0
  %928 = vmatpush2.bf16.msra.mxu0 0
  %929 = vmatprep.subr.bf16.mxu0 0
  %930 = vmatpush2.bf16.msra.mxu0 0
  %931 = vmatprep.subr.bf16.mxu0 0
  %932 = vmatpush2.bf16.msra.mxu0 0
  %933 = vmatprep.subr.bf16.mxu0 0
  %934 = vmatpush2.bf16.msra.mxu0 0
  %935 = vmatprep.subr.bf16.mxu0 0
  %936 = vmatpush2.bf16.msra.mxu0 0
  %937 = vmatprep.subr.bf16.mxu0 0
  %938 = vmatpush2.bf16.msra.mxu0 0
  %939 = vmatprep.subr.bf16.mxu0 0
  %940 = vmatpush2.bf16.msra.mxu0 0
  %941 = vmatprep.subr.bf16.mxu0 0
  %942 = vmatpush2.bf16.msra.mxu0 0
  %943 = vmatprep.mubr.bf16.mxu0 0
  %944 = vmatmul.mubr.bf16.gmra.mxu0 %v762
  %v945 = vpop.f32.mrf.mxu0
  %v946 = vadd.f32 %v833, %v945
  %v947 = vpop.f32.mrf.mxu0
  %v948 = vadd.f32 %v835, %v947
  %v949 = vpop.f32.mrf.mxu0
  %v950 = vadd.f32 %v837, %v949
  %v951 = vpop.f32.mrf.mxu0
  %v952 = vadd.f32 %v839, %v951
  %953 = vmatprep.mubr.bf16.mxu0 0
  %954 = vmatmul.mubr.bf16.gmra.mxu0 %v765
  %v955 = vpop.f32.mrf.mxu0
  %v956 = vadd.f32 %v843, %v955
  %v957 = vpop.f32.mrf.mxu0
  %v958 = vadd.f32 %v845, %v957
  %v959 = vpop.f32.mrf.mxu0
  %v960 = vadd.f32 %v847, %v959
  %v961 = vpop.f32.mrf.mxu0
  %v962 = vadd.f32 %v849, %v961
  %963 = vmatprep.mubr.bf16.mxu0 0
  %964 = vmatmul.mubr.bf16.gmra.mxu0 %v768
  %v965 = vpop.f32.mrf.mxu0
  %v966 = vadd.f32 %v853, %v965
  %v967 = vpop.f32.mrf.mxu0
  %v968 = vadd.f32 %v855, %v967
  %v969 = vpop.f32.mrf.mxu0
  %v970 = vadd.f32 %v857, %v969
  %v971 = vpop.f32.mrf.mxu0
  %v972 = vadd.f32 %v859, %v971
  %973 = vmatprep.mubr.bf16.mxu0 0
  %974 = vmatmul.mubr.bf16.gmra.mxu0 %v771
  %v975 = vpop.f32.mrf.mxu0
  %v976 = vadd.f32 %v863, %v975
  %v977 = vpop.f32.mrf.mxu0
  %v978 = vadd.f32 %v865, %v977
  %v979 = vpop.f32.mrf.mxu0
  %v980 = vadd.f32 %v867, %v979
  %v981 = vpop.f32.mrf.mxu0
  %v982 = vadd.f32 %v869, %v981
  %983 = vmatprep.mubr.bf16.mxu0 0
  %984 = vmatmul.mubr.bf16.gmra.mxu0 %v774
  %v985 = vpop.f32.mrf.mxu0
  %v986 = vadd.f32 %v873, %v985
  %v987 = vpop.f32.mrf.mxu0
  %v988 = vadd.f32 %v875, %v987
  %v989 = vpop.f32.mrf.mxu0
  %v990 = vadd.f32 %v877, %v989
  %v991 = vpop.f32.mrf.mxu0
  %v992 = vadd.f32 %v879, %v991
  %993 = vmatprep.mubr.bf16.mxu0 0
  %994 = vmatmul.mubr.bf16.gmra.mxu0 %v777
  %v995 = vpop.f32.mrf.mxu0
  %v996 = vadd.f32 %v883, %v995
  %v997 = vpop.f32.mrf.mxu0
  %v998 = vadd.f32 %v885, %v997
  %v999 = vpop.f32.mrf.mxu0
  %v1000 = vadd.f32 %v887, %v999
  %v1001 = vpop.f32.mrf.mxu0
  %v1002 = vadd.f32 %v889, %v1001
  %1003 = vmatprep.mubr.bf16.mxu0 0
  %1004 = vmatmul.mubr.bf16.gmra.mxu0 %v780
  %v1005 = vpop.f32.mrf.mxu0
  %v1006 = vadd.f32 %v893, %v1005
  %v1007 = vpop.f32.mrf.mxu0
  %v1008 = vadd.f32 %v895, %v1007
  %v1009 = vpop.f32.mrf.mxu0
  %v1010 = vadd.f32 %v897, %v1009
  %v1011 = vpop.f32.mrf.mxu0
  %v1012 = vadd.f32 %v899, %v1011
  %1013 = vmatprep.mubr.bf16.mxu0 0
  %1014 = vmatmul.mubr.bf16.gmra.mxu0 %v783
  %v1015 = vpop.f32.mrf.mxu0
  %v1016 = vadd.f32 %v903, %v1015
  %v1017 = vpop.f32.mrf.mxu0
  %v1018 = vadd.f32 %v905, %v1017
  %v1019 = vpop.f32.mrf.mxu0
  %v1020 = vadd.f32 %v907, %v1019
  %v1021 = vpop.f32.mrf.mxu0
  %v1022 = vadd.f32 %v909, %v1021
  %1023 = vdwg.mxu0
  %1024 = vmatprep.subr.bf16.mxu0 %v627
  %1025 = vmatpush1.bf16.msra.mxu0 %v626
  %1026 = vmatprep.subr.bf16.mxu0 %v623
  %1027 = vmatpush1.bf16.msra.mxu0 %v622
  %1028 = vmatprep.subr.bf16.mxu0 %v619
  %1029 = vmatpush1.bf16.msra.mxu0 %v618
  %1030 = vmatprep.subr.bf16.mxu0 %v615
  %1031 = vmatpush1.bf16.msra.mxu0 %v614
  %1032 = vmatprep.subr.bf16.mxu0 %v611
  %1033 = vmatpush1.bf16.msra.mxu0 %v610
  %1034 = vmatprep.subr.bf16.mxu0 %v607
  %1035 = vmatpush1.bf16.msra.mxu0 %v606
  %1036 = vmatprep.subr.bf16.mxu0 %v603
  %1037 = vmatpush1.bf16.msra.mxu0 %v602
  %1038 = vmatprep.subr.bf16.mxu0 %v599
  %1039 = vmatpush1.bf16.msra.mxu0 %v598
  %1040 = vmatprep.subr.bf16.mxu0 %v659
  %1041 = vmatpush2.bf16.msra.mxu0 %v658
  %1042 = vmatprep.subr.bf16.mxu0 %v655
  %1043 = vmatpush2.bf16.msra.mxu0 %v654
  %1044 = vmatprep.subr.bf16.mxu0 %v651
  %1045 = vmatpush2.bf16.msra.mxu0 %v650
  %1046 = vmatprep.subr.bf16.mxu0 %v647
  %1047 = vmatpush2.bf16.msra.mxu0 %v646
  %1048 = vmatprep.subr.bf16.mxu0 %v643
  %1049 = vmatpush2.bf16.msra.mxu0 %v642
  %1050 = vmatprep.subr.bf16.mxu0 %v639
  %1051 = vmatpush2.bf16.msra.mxu0 %v638
  %1052 = vmatprep.subr.bf16.mxu0 %v635
  %1053 = vmatpush2.bf16.msra.mxu0 %v634
  %1054 = vmatprep.subr.bf16.mxu0 %v631
  %1055 = vmatpush2.bf16.msra.mxu0 %v630
  %1056 = vmatprep.mubr.bf16.mxu0 %v311
  %1057 = vmatmul.mubr.bf16.gmra.mxu0 %v310
  %v1058 = vpop.f32.mrf.mxu0
  %v1059 = vadd.f32 %v153, %v1058
  %v1060 = vpop.f32.mrf.mxu0
  %v1061 = vadd.f32 %v153, %v1060
  %v1062 = vpop.f32.mrf.mxu0
  %v1063 = vadd.f32 %v158, %v1062
  %v1064 = vpop.f32.mrf.mxu0
  %v1065 = vadd.f32 %v158, %v1064
  %1066 = vmatprep.mubr.bf16.mxu0 %v314
  %1067 = vmatmul.mubr.bf16.gmra.mxu0 %v313
  %v1068 = vpop.f32.mrf.mxu0
  %v1069 = vadd.f32 %v163, %v1068
  %v1070 = vpop.f32.mrf.mxu0
  %v1071 = vadd.f32 %v163, %v1070
  %v1072 = vpop.f32.mrf.mxu0
  %v1073 = vadd.f32 %v168, %v1072
  %v1074 = vpop.f32.mrf.mxu0
  %v1075 = vadd.f32 %v168, %v1074
  %1076 = vmatprep.mubr.bf16.mxu0 %v317
  %1077 = vmatmul.mubr.bf16.gmra.mxu0 %v316
  %v1078 = vpop.f32.mrf.mxu0
  %v1079 = vadd.f32 %v173, %v1078
  %v1080 = vpop.f32.mrf.mxu0
  %v1081 = vadd.f32 %v173, %v1080
  %v1082 = vpop.f32.mrf.mxu0
  %v1083 = vadd.f32 %v178, %v1082
  %v1084 = vpop.f32.mrf.mxu0
  %v1085 = vadd.f32 %v178, %v1084
  %1086 = vmatprep.mubr.bf16.mxu0 %v320
  %1087 = vmatmul.mubr.bf16.gmra.mxu0 %v319
  %v1088 = vpop.f32.mrf.mxu0
  %v1089 = vadd.f32 %v183, %v1088
  %v1090 = vpop.f32.mrf.mxu0
  %v1091 = vadd.f32 %v183, %v1090
  %v1092 = vpop.f32.mrf.mxu0
  %v1093 = vadd.f32 %v188, %v1092
  %v1094 = vpop.f32.mrf.mxu0
  %v1095 = vadd.f32 %v188, %v1094
  %1096 = vmatprep.mubr.bf16.mxu0 %v323
  %1097 = vmatmul.mubr.bf16.gmra.mxu0 %v322
  %v1098 = vpop.f32.mrf.mxu0
  %v1099 = vadd.f32 %v193, %v1098
  %v1100 = vpop.f32.mrf.mxu0
  %v1101 = vadd.f32 %v193, %v1100
  %v1102 = vpop.f32.mrf.mxu0
  %v1103 = vadd.f32 %v198, %v1102
  %v1104 = vpop.f32.mrf.mxu0
  %v1105 = vadd.f32 %v198, %v1104
  %1106 = vmatprep.mubr.bf16.mxu0 %v326
  %1107 = vmatmul.mubr.bf16.gmra.mxu0 %v325
  %v1108 = vpop.f32.mrf.mxu0
  %v1109 = vadd.f32 %v203, %v1108
  %v1110 = vpop.f32.mrf.mxu0
  %v1111 = vadd.f32 %v203, %v1110
  %v1112 = vpop.f32.mrf.mxu0
  %v1113 = vadd.f32 %v208, %v1112
  %v1114 = vpop.f32.mrf.mxu0
  %v1115 = vadd.f32 %v208, %v1114
  %1116 = vmatprep.mubr.bf16.mxu0 %v329
  %1117 = vmatmul.mubr.bf16.gmra.mxu0 %v328
  %v1118 = vpop.f32.mrf.mxu0
  %v1119 = vadd.f32 %v213, %v1118
  %v1120 = vpop.f32.mrf.mxu0
  %v1121 = vadd.f32 %v213, %v1120
  %v1122 = vpop.f32.mrf.mxu0
  %v1123 = vadd.f32 %v218, %v1122
  %v1124 = vpop.f32.mrf.mxu0
  %v1125 = vadd.f32 %v218, %v1124
  %1126 = vmatprep.mubr.bf16.mxu0 %v332
  %1127 = vmatmul.mubr.bf16.gmra.mxu0 %v331
  %v1128 = vpop.f32.mrf.mxu0
  %v1129 = vadd.f32 %v223, %v1128
  %v1130 = vpop.f32.mrf.mxu0
  %v1131 = vadd.f32 %v223, %v1130
  %v1132 = vpop.f32.mrf.mxu0
  %v1133 = vadd.f32 %v228, %v1132
  %v1134 = vpop.f32.mrf.mxu0
  %v1135 = vadd.f32 %v228, %v1134
  %1136 = vdwg.mxu0
  %1137 = vmatprep.subr.bf16.mxu0 0
  %1138 = vmatpush1.bf16.msra.mxu0 0
  %1139 = vmatprep.subr.bf16.mxu0 0
  %1140 = vmatpush1.bf16.msra.mxu0 0
  %1141 = vmatprep.subr.bf16.mxu0 0
  %1142 = vmatpush1.bf16.msra.mxu0 0
  %1143 = vmatprep.subr.bf16.mxu0 %v796
  %1144 = vmatpush1.bf16.msra.mxu0 %v793
  %1145 = vmatprep.subr.bf16.mxu0 %v675
  %1146 = vmatpush1.bf16.msra.mxu0 %v674
  %1147 = vmatprep.subr.bf16.mxu0 %v671
  %1148 = vmatpush1.bf16.msra.mxu0 %v670
  %1149 = vmatprep.subr.bf16.mxu0 %v667
  %1150 = vmatpush1.bf16.msra.mxu0 %v666
  %1151 = vmatprep.subr.bf16.mxu0 %v663
  %1152 = vmatpush1.bf16.msra.mxu0 %v662
  %1153 = vmatprep.subr.bf16.mxu0 0
  %1154 = vmatpush2.bf16.msra.mxu0 0
  %1155 = vmatprep.subr.bf16.mxu0 0
  %1156 = vmatpush2.bf16.msra.mxu0 0
  %1157 = vmatprep.subr.bf16.mxu0 0
  %1158 = vmatpush2.bf16.msra.mxu0 0
  %1159 = vmatprep.subr.bf16.mxu0 0
  %1160 = vmatpush2.bf16.msra.mxu0 0
  %1161 = vmatprep.subr.bf16.mxu0 0
  %1162 = vmatpush2.bf16.msra.mxu0 0
  %1163 = vmatprep.subr.bf16.mxu0 0
  %1164 = vmatpush2.bf16.msra.mxu0 0
  %1165 = vmatprep.subr.bf16.mxu0 0
  %1166 = vmatpush2.bf16.msra.mxu0 0
  %1167 = vmatprep.subr.bf16.mxu0 0
  %1168 = vmatpush2.bf16.msra.mxu0 0
  %1169 = vmatprep.mubr.bf16.mxu0 0
  %1170 = vmatmul.mubr.bf16.gmra.mxu0 %v762
  %v1171 = vpop.f32.mrf.mxu0
  %v1172 = vadd.f32 %v1059, %v1171
  %v1173 = vpop.f32.mrf.mxu0
  %v1174 = vadd.f32 %v1061, %v1173
  %v1175 = vpop.f32.mrf.mxu0
  %v1176 = vadd.f32 %v1063, %v1175
  %v1177 = vpop.f32.mrf.mxu0
  %v1178 = vadd.f32 %v1065, %v1177
  %1179 = vmatprep.mubr.bf16.mxu0 0
  %1180 = vmatmul.mubr.bf16.gmra.mxu0 %v765
  %v1181 = vpop.f32.mrf.mxu0
  %v1182 = vadd.f32 %v1069, %v1181
  %v1183 = vpop.f32.mrf.mxu0
  %v1184 = vadd.f32 %v1071, %v1183
  %v1185 = vpop.f32.mrf.mxu0
  %v1186 = vadd.f32 %v1073, %v1185
  %v1187 = vpop.f32.mrf.mxu0
  %v1188 = vadd.f32 %v1075, %v1187
  %1189 = vmatprep.mubr.bf16.mxu0 0
  %1190 = vmatmul.mubr.bf16.gmra.mxu0 %v768
  %v1191 = vpop.f32.mrf.mxu0
  %v1192 = vadd.f32 %v1079, %v1191
  %v1193 = vpop.f32.mrf.mxu0
  %v1194 = vadd.f32 %v1081, %v1193
  %v1195 = vpop.f32.mrf.mxu0
  %v1196 = vadd.f32 %v1083, %v1195
  %v1197 = vpop.f32.mrf.mxu0
  %v1198 = vadd.f32 %v1085, %v1197
  %1199 = vmatprep.mubr.bf16.mxu0 0
  %1200 = vmatmul.mubr.bf16.gmra.mxu0 %v771
  %v1201 = vpop.f32.mrf.mxu0
  %v1202 = vadd.f32 %v1089, %v1201
  %v1203 = vpop.f32.mrf.mxu0
  %v1204 = vadd.f32 %v1091, %v1203
  %v1205 = vpop.f32.mrf.mxu0
  %v1206 = vadd.f32 %v1093, %v1205
  %v1207 = vpop.f32.mrf.mxu0
  %v1208 = vadd.f32 %v1095, %v1207
  %1209 = vmatprep.mubr.bf16.mxu0 0
  %1210 = vmatmul.mubr.bf16.gmra.mxu0 %v774
  %v1211 = vpop.f32.mrf.mxu0
  %v1212 = vadd.f32 %v1099, %v1211
  %v1213 = vpop.f32.mrf.mxu0
  %v1214 = vadd.f32 %v1101, %v1213
  %v1215 = vpop.f32.mrf.mxu0
  %v1216 = vadd.f32 %v1103, %v1215
  %v1217 = vpop.f32.mrf.mxu0
  %v1218 = vadd.f32 %v1105, %v1217
  %1219 = vmatprep.mubr.bf16.mxu0 0
  %1220 = vmatmul.mubr.bf16.gmra.mxu0 %v777
  %v1221 = vpop.f32.mrf.mxu0
  %v1222 = vadd.f32 %v1109, %v1221
  %v1223 = vpop.f32.mrf.mxu0
  %v1224 = vadd.f32 %v1111, %v1223
  %v1225 = vpop.f32.mrf.mxu0
  %v1226 = vadd.f32 %v1113, %v1225
  %v1227 = vpop.f32.mrf.mxu0
  %v1228 = vadd.f32 %v1115, %v1227
  %1229 = vmatprep.mubr.bf16.mxu0 0
  %1230 = vmatmul.mubr.bf16.gmra.mxu0 %v780
  %v1231 = vpop.f32.mrf.mxu0
  %v1232 = vadd.f32 %v1119, %v1231
  %v1233 = vpop.f32.mrf.mxu0
  %v1234 = vadd.f32 %v1121, %v1233
  %v1235 = vpop.f32.mrf.mxu0
  %v1236 = vadd.f32 %v1123, %v1235
  %v1237 = vpop.f32.mrf.mxu0
  %v1238 = vadd.f32 %v1125, %v1237
  %1239 = vmatprep.mubr.bf16.mxu0 0
  %1240 = vmatmul.mubr.bf16.gmra.mxu0 %v783
  %v1241 = vpop.f32.mrf.mxu0
  %v1242 = vadd.f32 %v1129, %v1241
  %v1243 = vpop.f32.mrf.mxu0
  %v1244 = vadd.f32 %v1131, %v1243
  %v1245 = vpop.f32.mrf.mxu0
  %v1246 = vadd.f32 %v1133, %v1245
  %v1247 = vpop.f32.mrf.mxu0
  %v1248 = vadd.f32 %v1135, %v1247
  %1249 = vdwg.mxu0
  %v1250 = vxor.u32 %v946, 2147483648
  %v1251 = vxor.u32 %v948, 2147483648
  %v1252 = vxor.u32 %v1172, 2147483648
  %v1253 = vxor.u32 %v1174, 2147483648
  %v1254 = vxor.u32 %v950, 2147483648
  %v1255 = vxor.u32 %v952, 2147483648
  %v1256 = vxor.u32 %v1176, 2147483648
  %v1257 = vxor.u32 %v1178, 2147483648
  %v1258 = vxor.u32 %v956, 2147483648
  %v1259 = vxor.u32 %v958, 2147483648
  %v1260 = vxor.u32 %v1182, 2147483648
  %v1261 = vxor.u32 %v1184, 2147483648
  %v1262 = vxor.u32 %v960, 2147483648
  %v1263 = vxor.u32 %v962, 2147483648
  %v1264 = vxor.u32 %v1186, 2147483648
  %v1265 = vxor.u32 %v1188, 2147483648
  %v1266 = vxor.u32 %v966, 2147483648
  %v1267 = vxor.u32 %v968, 2147483648
  %v1268 = vxor.u32 %v1192, 2147483648
  %v1269 = vxor.u32 %v1194, 2147483648
  %v1270 = vxor.u32 %v970, 2147483648
  %v1271 = vxor.u32 %v972, 2147483648
  %v1272 = vxor.u32 %v1196, 2147483648
  %v1273 = vxor.u32 %v1198, 2147483648
  %v1274 = vxor.u32 %v976, 2147483648
  %v1275 = vxor.u32 %v978, 2147483648
  %v1276 = vxor.u32 %v1202, 2147483648
  %v1277 = vxor.u32 %v1204, 2147483648
  %v1278 = vxor.u32 %v980, 2147483648
  %v1279 = vxor.u32 %v982, 2147483648
  %v1280 = vxor.u32 %v1206, 2147483648
  %v1281 = vxor.u32 %v1208, 2147483648
  %v1282 = vxor.u32 %v986, 2147483648
  %v1283 = vxor.u32 %v988, 2147483648
  %v1284 = vxor.u32 %v1212, 2147483648
  %v1285 = vxor.u32 %v1214, 2147483648
  %v1286 = vxor.u32 %v990, 2147483648
  %v1287 = vxor.u32 %v992, 2147483648
  %v1288 = vxor.u32 %v1216, 2147483648
  %v1289 = vxor.u32 %v1218, 2147483648
  %v1290 = vxor.u32 %v996, 2147483648
  %v1291 = vxor.u32 %v998, 2147483648
  %v1292 = vxor.u32 %v1222, 2147483648
  %v1293 = vxor.u32 %v1224, 2147483648
  %v1294 = vxor.u32 %v1000, 2147483648
  %v1295 = vxor.u32 %v1002, 2147483648
  %v1296 = vxor.u32 %v1226, 2147483648
  %v1297 = vxor.u32 %v1228, 2147483648
  %v1298 = vmul.f32 %v1250, 1.442695
  %v1299 = vpow.pop %v1298
  %v1300 = vmul.f32 %v1251, 1.442695
  %v1301 = vpow.pop %v1300
  %v1302 = vmul.f32 %v1252, 1.442695
  %v1303 = vpow.pop %v1302
  %v1304 = vmul.f32 %v1253, 1.442695
  %v1305 = vpow.pop %v1304
  %v1306 = vmul.f32 %v1254, 1.442695
  %v1307 = vpow.pop %v1306
  %v1308 = vmul.f32 %v1255, 1.442695
  %v1309 = vpow.pop %v1308
  %v1310 = vmul.f32 %v1256, 1.442695
  %v1311 = vpow.pop %v1310
  %v1312 = vmul.f32 %v1257, 1.442695
  %v1313 = vpow.pop %v1312
  %v1314 = vmul.f32 %v1258, 1.442695
  %v1315 = vpow.pop %v1314
  %v1316 = vmul.f32 %v1259, 1.442695
  %v1317 = vpow.pop %v1316
  %v1318 = vmul.f32 %v1260, 1.442695
  %v1319 = vpow.pop %v1318
  %v1320 = vmul.f32 %v1261, 1.442695
  %v1321 = vpow.pop %v1320
  %v1322 = vmul.f32 %v1262, 1.442695
  %v1323 = vpow.pop %v1322
  %v1324 = vmul.f32 %v1263, 1.442695
  %v1325 = vpow.pop %v1324
  %v1326 = vmul.f32 %v1264, 1.442695
  %v1327 = vpow.pop %v1326
  %v1328 = vmul.f32 %v1265, 1.442695
  %v1329 = vpow.pop %v1328
  %v1330 = vmul.f32 %v1266, 1.442695
  %v1331 = vpow.pop %v1330
  %v1332 = vmul.f32 %v1267, 1.442695
  %v1333 = vpow.pop %v1332
  %v1334 = vmul.f32 %v1268, 1.442695
  %v1335 = vpow.pop %v1334
  %v1336 = vmul.f32 %v1269, 1.442695
  %v1337 = vpow.pop %v1336
  %v1338 = vmul.f32 %v1270, 1.442695
  %v1339 = vpow.pop %v1338
  %v1340 = vmul.f32 %v1271, 1.442695
  %v1341 = vpow.pop %v1340
  %v1342 = vmul.f32 %v1272, 1.442695
  %v1343 = vpow.pop %v1342
  %v1344 = vmul.f32 %v1273, 1.442695
  %v1345 = vpow.pop %v1344
  %v1346 = vmul.f32 %v1274, 1.442695
  %v1347 = vpow.pop %v1346
  %v1348 = vmul.f32 %v1275, 1.442695
  %v1349 = vpow.pop %v1348
  %v1350 = vmul.f32 %v1276, 1.442695
  %v1351 = vpow.pop %v1350
  %v1352 = vmul.f32 %v1277, 1.442695
  %v1353 = vpow.pop %v1352
  %v1354 = vmul.f32 %v1278, 1.442695
  %v1355 = vpow.pop %v1354
  %v1356 = vmul.f32 %v1279, 1.442695
  %v1357 = vpow.pop %v1356
  %v1358 = vmul.f32 %v1280, 1.442695
  %v1359 = vpow.pop %v1358
  %v1360 = vmul.f32 %v1281, 1.442695
  %v1361 = vpow.pop %v1360
  %v1362 = vmul.f32 %v1282, 1.442695
  %v1363 = vpow.pop %v1362
  %v1364 = vmul.f32 %v1283, 1.442695
  %v1365 = vpow.pop %v1364
  %v1366 = vmul.f32 %v1284, 1.442695
  %v1367 = vpow.pop %v1366
  %v1368 = vmul.f32 %v1285, 1.442695
  %v1369 = vpow.pop %v1368
  %v1370 = vmul.f32 %v1286, 1.442695
  %v1371 = vpow.pop %v1370
  %v1372 = vmul.f32 %v1287, 1.442695
  %v1373 = vpow.pop %v1372
  %v1374 = vmul.f32 %v1288, 1.442695
  %v1375 = vpow.pop %v1374
  %v1376 = vmul.f32 %v1289, 1.442695
  %v1377 = vpow.pop %v1376
  %v1378 = vmul.f32 %v1290, 1.442695
  %v1379 = vpow.pop %v1378
  %v1380 = vmul.f32 %v1291, 1.442695
  %v1381 = vpow.pop %v1380
  %v1382 = vmul.f32 %v1292, 1.442695
  %v1383 = vpow.pop %v1382
  %v1384 = vmul.f32 %v1293, 1.442695
  %v1385 = vpow.pop %v1384
  %v1386 = vmul.f32 %v1294, 1.442695
  %v1387 = vpow.pop %v1386
  %v1388 = vmul.f32 %v1295, 1.442695
  %v1389 = vpow.pop %v1388
  %v1390 = vmul.f32 %v1296, 1.442695
  %v1391 = vpow.pop %v1390
  %v1392 = vmul.f32 %v1297, 1.442695
  %v1393 = vpow.pop %v1392
  %v1394 = vadd.f32 %v1299, 1.0
  %v1395 = vadd.f32 %v1301, 1.0
  %v1396 = vadd.f32 %v1303, 1.0
  %v1397 = vadd.f32 %v1305, 1.0
  %v1398 = vadd.f32 %v1307, 1.0
  %v1399 = vadd.f32 %v1309, 1.0
  %v1400 = vadd.f32 %v1311, 1.0
  %v1401 = vadd.f32 %v1313, 1.0
  %v1402 = vadd.f32 %v1315, 1.0
  %v1403 = vadd.f32 %v1317, 1.0
  %v1404 = vadd.f32 %v1319, 1.0
  %v1405 = vadd.f32 %v1321, 1.0
  %v1406 = vadd.f32 %v1323, 1.0
  %v1407 = vadd.f32 %v1325, 1.0
  %v1408 = vadd.f32 %v1327, 1.0
  %v1409 = vadd.f32 %v1329, 1.0
  %v1410 = vadd.f32 %v1331, 1.0
  %v1411 = vadd.f32 %v1333, 1.0
  %v1412 = vadd.f32 %v1335, 1.0
  %v1413 = vadd.f32 %v1337, 1.0
  %v1414 = vadd.f32 %v1339, 1.0
  %v1415 = vadd.f32 %v1341, 1.0
  %v1416 = vadd.f32 %v1343, 1.0
  %v1417 = vadd.f32 %v1345, 1.0
  %v1418 = vadd.f32 %v1347, 1.0
  %v1419 = vadd.f32 %v1349, 1.0
  %v1420 = vadd.f32 %v1351, 1.0
  %v1421 = vadd.f32 %v1353, 1.0
  %v1422 = vadd.f32 %v1355, 1.0
  %v1423 = vadd.f32 %v1357, 1.0
  %v1424 = vadd.f32 %v1359, 1.0
  %v1425 = vadd.f32 %v1361, 1.0
  %v1426 = vadd.f32 %v1363, 1.0
  %v1427 = vadd.f32 %v1365, 1.0
  %v1428 = vadd.f32 %v1367, 1.0
  %v1429 = vadd.f32 %v1369, 1.0
  %v1430 = vadd.f32 %v1371, 1.0
  %v1431 = vadd.f32 %v1373, 1.0
  %v1432 = vadd.f32 %v1375, 1.0
  %v1433 = vadd.f32 %v1377, 1.0
  %v1434 = vadd.f32 %v1379, 1.0
  %v1435 = vadd.f32 %v1381, 1.0
  %v1436 = vadd.f32 %v1383, 1.0
  %v1437 = vadd.f32 %v1385, 1.0
  %v1438 = vadd.f32 %v1387, 1.0
  %v1439 = vadd.f32 %v1389, 1.0
  %v1440 = vadd.f32 %v1391, 1.0
  %v1441 = vadd.f32 %v1393, 1.0
  %v1442 = vrcp.pop %v1394
  %v1443 = vmul.f32 1.0, %v1442
  %v1444 = vrcp.pop %v1395
  %v1445 = vmul.f32 1.0, %v1444
  %v1446 = vrcp.pop %v1396
  %v1447 = vmul.f32 1.0, %v1446
  %v1448 = vrcp.pop %v1397
  %v1449 = vmul.f32 1.0, %v1448
  %v1450 = vrcp.pop %v1398
  %v1451 = vmul.f32 1.0, %v1450
  %v1452 = vrcp.pop %v1399
  %v1453 = vmul.f32 1.0, %v1452
  %v1454 = vrcp.pop %v1400
  %v1455 = vmul.f32 1.0, %v1454
  %v1456 = vrcp.pop %v1401
  %v1457 = vmul.f32 1.0, %v1456
  %v1458 = vrcp.pop %v1402
  %v1459 = vmul.f32 1.0, %v1458
  %v1460 = vrcp.pop %v1403
  %v1461 = vmul.f32 1.0, %v1460
  %v1462 = vrcp.pop %v1404
  %v1463 = vmul.f32 1.0, %v1462
  %v1464 = vrcp.pop %v1405
  %v1465 = vmul.f32 1.0, %v1464
  %v1466 = vrcp.pop %v1406
  %v1467 = vmul.f32 1.0, %v1466
  %v1468 = vrcp.pop %v1407
  %v1469 = vmul.f32 1.0, %v1468
  %v1470 = vrcp.pop %v1408
  %v1471 = vmul.f32 1.0, %v1470
  %v1472 = vrcp.pop %v1409
  %v1473 = vmul.f32 1.0, %v1472
  %v1474 = vrcp.pop %v1410
  %v1475 = vmul.f32 1.0, %v1474
  %v1476 = vrcp.pop %v1411
  %v1477 = vmul.f32 1.0, %v1476
  %v1478 = vrcp.pop %v1412
  %v1479 = vmul.f32 1.0, %v1478
  %v1480 = vrcp.pop %v1413
  %v1481 = vmul.f32 1.0, %v1480
  %v1482 = vrcp.pop %v1414
  %v1483 = vmul.f32 1.0, %v1482
  %v1484 = vrcp.pop %v1415
  %v1485 = vmul.f32 1.0, %v1484
  %v1486 = vrcp.pop %v1416
  %v1487 = vmul.f32 1.0, %v1486
  %v1488 = vrcp.pop %v1417
  %v1489 = vmul.f32 1.0, %v1488
  %v1490 = vrcp.pop %v1418
  %v1491 = vmul.f32 1.0, %v1490
  %v1492 = vrcp.pop %v1419
  %v1493 = vmul.f32 1.0, %v1492
  %v1494 = vrcp.pop %v1420
  %v1495 = vmul.f32 1.0, %v1494
  %v1496 = vrcp.pop %v1421
  %v1497 = vmul.f32 1.0, %v1496
  %v1498 = vrcp.pop %v1422
  %v1499 = vmul.f32 1.0, %v1498
  %v1500 = vrcp.pop %v1423
  %v1501 = vmul.f32 1.0, %v1500
  %v1502 = vrcp.pop %v1424
  %v1503 = vmul.f32 1.0, %v1502
  %v1504 = vrcp.pop %v1425
  %v1505 = vmul.f32 1.0, %v1504
  %v1506 = vrcp.pop %v1426
  %v1507 = vmul.f32 1.0, %v1506
  %v1508 = vrcp.pop %v1427
  %v1509 = vmul.f32 1.0, %v1508
  %v1510 = vrcp.pop %v1428
  %v1511 = vmul.f32 1.0, %v1510
  %v1512 = vrcp.pop %v1429
  %v1513 = vmul.f32 1.0, %v1512
  %v1514 = vrcp.pop %v1430
  %v1515 = vmul.f32 1.0, %v1514
  %v1516 = vrcp.pop %v1431
  %v1517 = vmul.f32 1.0, %v1516
  %v1518 = vrcp.pop %v1432
  %v1519 = vmul.f32 1.0, %v1518
  %v1520 = vrcp.pop %v1433
  %v1521 = vmul.f32 1.0, %v1520
  %v1522 = vrcp.pop %v1434
  %v1523 = vmul.f32 1.0, %v1522
  %v1524 = vrcp.pop %v1435
  %v1525 = vmul.f32 1.0, %v1524
  %v1526 = vrcp.pop %v1436
  %v1527 = vmul.f32 1.0, %v1526
  %v1528 = vrcp.pop %v1437
  %v1529 = vmul.f32 1.0, %v1528
  %v1530 = vrcp.pop %v1438
  %v1531 = vmul.f32 1.0, %v1530
  %v1532 = vrcp.pop %v1439
  %v1533 = vmul.f32 1.0, %v1532
  %v1534 = vrcp.pop %v1440
  %v1535 = vmul.f32 1.0, %v1534
  %v1536 = vrcp.pop %v1441
  %v1537 = vmul.f32 1.0, %v1536
  %v1538 = vtanh.pop %v1006
  %v1539 = vtanh.pop %v1008
  %v1540 = vtanh.pop %v1232
  %v1541 = vtanh.pop %v1234
  %v1542 = vtanh.pop %v1010
  %v1543 = vtanh.pop %v1012
  %v1544 = vtanh.pop %v1236
  %v1545 = vtanh.pop %v1238
  %v1546 = vtanh.pop %v1016
  %v1547 = vtanh.pop %v1018
  %v1548 = vtanh.pop %v1242
  %v1549 = vtanh.pop %v1244
  %v1550 = vtanh.pop %v1020
  %v1551 = vtanh.pop %v1022
  %v1552 = vtanh.pop %v1246
  %v1553 = vtanh.pop %v1248
  %v1554 = vld [vmem:[%s3] sm:$0xff]
  %v1555 = vld [vmem:[%s3 + $0x8] sm:$0xff]
  %v1556 = vld [vmem:[%s3 + $0x10] sm:$0xff]
  %v1557 = vld [vmem:[%s3 + $0x18] sm:$0xff]
  %v1558 = vld [vmem:[%s3 + $0x20] sm:$0xff]
  %v1559 = vld [vmem:[%s3 + $0x28] sm:$0xff]
  %v1560 = vld [vmem:[%s3 + $0x30] sm:$0xff]
  %v1561 = vld [vmem:[%s3 + $0x38] sm:$0xff]
  %v1562 = vld [vmem:[%s3 + $0x40] sm:$0xff]
  %v1563 = vld [vmem:[%s3 + $0x48] sm:$0xff]
  %v1564 = vld [vmem:[%s3 + $0x50] sm:$0xff]
  %v1565 = vld [vmem:[%s3 + $0x58] sm:$0xff]
  %v1566 = vld [vmem:[%s3 + $0x60] sm:$0xff]
  %v1567 = vld [vmem:[%s3 + $0x68] sm:$0xff]
  %v1568 = vld [vmem:[%s3 + $0x70] sm:$0xff]
  %v1569 = vld [vmem:[%s3 + $0x78] sm:$0xff]
  %v1570 = vmul.f32 %v1475, %v1554
  %v1571 = vmul.f32 %v1477, %v1555
  %v1572 = vmul.f32 %v1479, %v1556
  %v1573 = vmul.f32 %v1481, %v1557
  %v1574 = vmul.f32 %v1483, %v1558
  %v1575 = vmul.f32 %v1485, %v1559
  %v1576 = vmul.f32 %v1487, %v1560
  %v1577 = vmul.f32 %v1489, %v1561
  %v1578 = vmul.f32 %v1491, %v1562
  %v1579 = vmul.f32 %v1493, %v1563
  %v1580 = vmul.f32 %v1495, %v1564
  %v1581 = vmul.f32 %v1497, %v1565
  %v1582 = vmul.f32 %v1499, %v1566
  %v1583 = vmul.f32 %v1501, %v1567
  %v1584 = vmul.f32 %v1503, %v1568
  %v1585 = vmul.f32 %v1505, %v1569
  %v1586 = vmul.f32 %v1443, %v1538
  %v1587 = vmul.f32 %v1445, %v1539
  %v1588 = vmul.f32 %v1447, %v1540
  %v1589 = vmul.f32 %v1449, %v1541
  %v1590 = vmul.f32 %v1451, %v1542
  %v1591 = vmul.f32 %v1453, %v1543
  %v1592 = vmul.f32 %v1455, %v1544
  %v1593 = vmul.f32 %v1457, %v1545
  %v1594 = vmul.f32 %v1459, %v1546
  %v1595 = vmul.f32 %v1461, %v1547
  %v1596 = vmul.f32 %v1463, %v1548
  %v1597 = vmul.f32 %v1465, %v1549
  %v1598 = vmul.f32 %v1467, %v1550
  %v1599 = vmul.f32 %v1469, %v1551
  %v1600 = vmul.f32 %v1471, %v1552
  %v1601 = vmul.f32 %v1473, %v1553
  %v1602 = vadd.f32 %v1570, %v1586
  %v1603 = vadd.f32 %v1571, %v1587
  %v1604 = vadd.f32 %v1572, %v1588
  %v1605 = vadd.f32 %v1573, %v1589
  %v1606 = vadd.f32 %v1574, %v1590
  %v1607 = vadd.f32 %v1575, %v1591
  %v1608 = vadd.f32 %v1576, %v1592
  %v1609 = vadd.f32 %v1577, %v1593
  %v1610 = vadd.f32 %v1578, %v1594
  %v1611 = vadd.f32 %v1579, %v1595
  %v1612 = vadd.f32 %v1580, %v1596
  %v1613 = vadd.f32 %v1581, %v1597
  %v1614 = vadd.f32 %v1582, %v1598
  %v1615 = vadd.f32 %v1583, %v1599
  %v1616 = vadd.f32 %v1584, %v1600
  %v1617 = vadd.f32 %v1585, %v1601
  %v1618 = vtanh.pop %v1602
  %v1619 = vtanh.pop %v1603
  %v1620 = vtanh.pop %v1604
  %v1621 = vtanh.pop %v1605
  %v1622 = vtanh.pop %v1606
  %v1623 = vtanh.pop %v1607
  %v1624 = vtanh.pop %v1608
  %v1625 = vtanh.pop %v1609
  %v1626 = vtanh.pop %v1610
  %v1627 = vtanh.pop %v1611
  %v1628 = vtanh.pop %v1612
  %v1629 = vtanh.pop %v1613
  %v1630 = vtanh.pop %v1614
  %v1631 = vtanh.pop %v1615
  %v1632 = vtanh.pop %v1616
  %v1633 = vtanh.pop %v1617
  %v1634 = vmul.f32 %v1507, %v1618
  %v1635 = vmul.f32 %v1509, %v1619
  %v1636 = vmul.f32 %v1511, %v1620
  %v1637 = vmul.f32 %v1513, %v1621
  %v1638 = vmul.f32 %v1515, %v1622
  %v1639 = vmul.f32 %v1517, %v1623
  %v1640 = vmul.f32 %v1519, %v1624
  %v1641 = vmul.f32 %v1521, %v1625
  %v1642 = vmul.f32 %v1523, %v1626
  %v1643 = vmul.f32 %v1525, %v1627
  %v1644 = vmul.f32 %v1527, %v1628
  %v1645 = vmul.f32 %v1529, %v1629
  %v1646 = vmul.f32 %v1531, %v1630
  %v1647 = vmul.f32 %v1533, %v1631
  %v1648 = vmul.f32 %v1535, %v1632
  %v1649 = vmul.f32 %v1537, %v1633
  %1650 = vst [vmem:[%s5] sm:$0xff] %v1602
  %1651 = vst [vmem:[%s5 + $0x8] sm:$0xff] %v1603
  %1652 = vst [vmem:[%s5 + $0x10] sm:$0xff] %v1604
  %1653 = vst [vmem:[%s5 + $0x18] sm:$0xff] %v1605
  %1654 = vst [vmem:[%s5 + $0x20] sm:$0xff] %v1606
  %1655 = vst [vmem:[%s5 + $0x28] sm:$0xff] %v1607
  %1656 = vst [vmem:[%s5 + $0x30] sm:$0xff] %v1608
  %1657 = vst [vmem:[%s5 + $0x38] sm:$0xff] %v1609
  %1658 = vst [vmem:[%s5 + $0x40] sm:$0xff] %v1610
  %1659 = vst [vmem:[%s5 + $0x48] sm:$0xff] %v1611
  %1660 = vst [vmem:[%s5 + $0x50] sm:$0xff] %v1612
  %1661 = vst [vmem:[%s5 + $0x58] sm:$0xff] %v1613
  %1662 = vst [vmem:[%s5 + $0x60] sm:$0xff] %v1614
  %1663 = vst [vmem:[%s5 + $0x68] sm:$0xff] %v1615
  %1664 = vst [vmem:[%s5 + $0x70] sm:$0xff] %v1616
  %1665 = vst [vmem:[%s5 + $0x78] sm:$0xff] %v1617
  %1666 = vst [vmem:[%s4] sm:$0xff] %v1634
  %1667 = vst [vmem:[%s4 + $0x8] sm:$0xff] %v1635
  %1668 = vst [vmem:[%s4 + $0x10] sm:$0xff] %v1636
  %1669 = vst [vmem:[%s4 + $0x18] sm:$0xff] %v1637
  %1670 = vst [vmem:[%s4 + $0x20] sm:$0xff] %v1638
  %1671 = vst [vmem:[%s4 + $0x28] sm:$0xff] %v1639
  %1672 = vst [vmem:[%s4 + $0x30] sm:$0xff] %v1640
  %1673 = vst [vmem:[%s4 + $0x38] sm:$0xff] %v1641
  %1674 = vst [vmem:[%s4 + $0x40] sm:$0xff] %v1642
  %1675 = vst [vmem:[%s4 + $0x48] sm:$0xff] %v1643
  %1676 = vst [vmem:[%s4 + $0x50] sm:$0xff] %v1644
  %1677 = vst [vmem:[%s4 + $0x58] sm:$0xff] %v1645
  %1678 = vst [vmem:[%s4 + $0x60] sm:$0xff] %v1646
  %1679 = vst [vmem:[%s4 + $0x68] sm:$0xff] %v1647
  %1680 = vst [vmem:[%s4 + $0x70] sm:$0xff] %v1648
  %1681 = vst [vmem:[%s4 + $0x78] sm:$0xff] %v1649
  // Predicated region
  $region18: #{conv_lstm_cell.1} parent=0 // pred_check
    _
  $region19: #{conv_lstm_cell.1} parent=0 // pred_check_branch
    %1683 = sbr.rel (0) target = $region21
  $region20: #{conv_lstm_cell.1} parent=0 // pred_region
    _
  $region21: #{conv_lstm_cell.1} parent=0 // pred_fallthru
    _
  // Predicated region
  $region22: #{conv_lstm_cell.1} parent=0 // pred_check
    _
  $region23: #{conv_lstm_cell.1} parent=0 // pred_check_branch
    %1685 = sbr.rel (0) target = $region25
  $region24: #{conv_lstm_cell.1} parent=0 // pred_region
    _
  $region25: #{conv_lstm_cell.1} parent=0 // pred_fallthru
    _
  // Predicated region
  $region26: #{conv_lstm_cell.1} parent=0 // pred_check
    _
  $region27: #{conv_lstm_cell.1} parent=0 // pred_check_branch
    %1687 = sbr.rel (0) target = $region29
  $region28: #{conv_lstm_cell.1} parent=0 // pred_region
    _
  $region29: #{conv_lstm_cell.1} parent=0 // pred_fallthru
    _
  // Predicated region
  $region30: #{conv_lstm_cell.1} parent=0 // pred_check
    _
  $region31: #{conv_lstm_cell.1} parent=0 // pred_check_branch
    %1689 = sbr.rel (0) target = $region33
  $region32: #{conv_lstm_cell.1} parent=0 // pred_region
    _
  $region33: #{conv_lstm_cell.1} parent=0 // pred_fallthru
    _

</llo_original>
